<compile_context>
chip_gen: v7x
topology: tpu7x:2x2x1
jax: 0.10.0
libtpu: 0.0.40
codegen_flags: <defaults>
</compile_context>

<pallas_src>
import functools

import jax
import jax.numpy as jnp
from jax import lax
from jax.experimental import pallas as pl
from jax.experimental.pallas import tpu as pltpu


# ------------------------------ fused flash-MHA kernel ------------------------------
def _mha_flash_kernel(xq_ref, xkv_ref, wq_ref, wkv_ref, wp_ref, b_ref, o_ref,
                      *, num_heads, head_size, q_tile, kv_tile, compute_dtype):
    # xq_ref : (1, tq, C)   query tile of x for this (b, qi) grid step
    # xkv_ref: (1, T,  C)   full sequence of x for batch b (K/V projected on the fly)
    # wq_ref : (C, H*hs)    fused per-head Wq, 1/sqrt(hs) pre-folded
    # wkv_ref: (C, 2*H*hs)  fused [Wk | Wv] for all heads
    # wp_ref : (C, C)       output projection, pre-transposed to (in, out)
    # b_ref  : (1, C)       output projection bias (f32)
    # o_ref  : (1, tq, C)
    H, hs = num_heads, head_size
    tq, tk = q_tile, kv_tile
    qi = pl.program_id(1)

    # ---- Q projection for this query tile (all heads, one lane-dense MXU matmul).
    xq = xq_ref[0]                                                     # (tq, C)
    q_all = jnp.dot(xq, wq_ref[...], preferred_element_type=jnp.float32)   # (tq, H*hs)
    q_heads = [q_all[:, h * hs:(h + 1) * hs].astype(compute_dtype) for h in range(H)]

    row_g = qi * tq + lax.broadcasted_iota(jnp.int32, (tq, tk), 0)     # global q rows
    neg_big = jnp.float32(-1e30)                                       # finite mask value

    def kv_step(j, carry):
        ms, ls, accs = carry
        start = pl.multiple_of(j * tk, tk)
        xkv = xkv_ref[0, pl.ds(start, tk), :]                          # (tk, C)
        # K/V projection for this KV tile (all heads fused).
        kv = jnp.dot(xkv, wkv_ref[...], preferred_element_type=jnp.float32)  # (tk, 2*H*hs)

        col_g = start + lax.broadcasted_iota(jnp.int32, (tq, tk), 1)
        causal = col_g <= row_g

        new_ms, new_ls, new_accs = [], [], []
        for h in range(H):
            kh = kv[:, h * hs:(h + 1) * hs].astype(compute_dtype)           # (tk, hs)
            vh = kv[:, (H + h) * hs:(H + h + 1) * hs].astype(compute_dtype) # (tk, hs)

            # scores = q @ k^T without materializing k.T (contract dim 1 of both).
            s = lax.dot_general(q_heads[h], kh,
                                dimension_numbers=(((1,), (1,)), ((), ())),
                                preferred_element_type=jnp.float32)     # (tq, tk)
            s = jnp.where(causal, s, neg_big)

            # Online-softmax update (f32).
            m_new = jnp.maximum(ms[h], jnp.max(s, axis=-1, keepdims=True))
            alpha = jnp.exp(ms[h] - m_new)
            p = jnp.exp(s - m_new)
            l_new = alpha * ls[h] + jnp.sum(p, axis=-1, keepdims=True)
            acc_new = alpha * accs[h] + jnp.dot(p.astype(compute_dtype), vh,
                                                preferred_element_type=jnp.float32)
            new_ms.append(m_new)
            new_ls.append(l_new)
            new_accs.append(acc_new)
        return tuple(new_ms), tuple(new_ls), tuple(new_accs)

    init = (tuple(jnp.full((tq, 1), -1e30, jnp.float32) for _ in range(H)),
            tuple(jnp.zeros((tq, 1), jnp.float32) for _ in range(H)),
            tuple(jnp.zeros((tq, hs), jnp.float32) for _ in range(H)))

    # Causal tile pruning: KV tiles strictly above the diagonal are skipped.
    num_kv = qi + 1
    ms, ls, accs = lax.fori_loop(0, num_kv, kv_step, init)

    # ---- normalize + head-concat fused into the output projection.
    y = b_ref[...].astype(jnp.float32)                                 # (1, C) broadcast
    for h in range(H):
        out_h = accs[h] * pl.reciprocal(ls[h], approx=True)            # (tq, hs) f32
        y = y + jnp.dot(out_h.astype(compute_dtype),
                        wp_ref[pl.ds(h * hs, hs), :],
                        preferred_element_type=jnp.float32)            # (tq, C)

    o_ref[0] = y.astype(o_ref.dtype)


# --------------------------------- wrapper ------------------------------------
def multi_head_attention(x, params, *, compute_dtype=jnp.float32, q_tile=None,
                         single_buffer_weights=False):
    """Full MultiHeadAttention forward (inference: dropout = identity).

    x: (B, T, C); params: wq/wk/wv (H, C, hs), w_proj (C, C) torch (out,in), b_proj (C,).
    compute_dtype: MXU operand dtype (use jnp.bfloat16 on real workloads).
    q_tile: query tile size (128-512 for production; must divide T, multiple of 8).
    single_buffer_weights: use pl.Buffered(1) on the grid-invariant weight blocks
        (VMEM saver for v7x's 64 MiB); off by default for maximum portability.
    """
    B, T, C = x.shape
    H, _, hs = params["wq"].shape
    assert H * hs == C, "num_heads * head_size must equal n_embd"

    if q_tile is None:
        q_tile = min(T, 256)
    tq = q_tile
    tk = tq
    assert T % tq == 0 and (tq % 8 == 0 or tq == T), "q_tile must divide T, multiple of 8"
    nq = T // tq

    # Fold 1/sqrt(hs) into Wq; fuse per-head weights into lane-dense slabs.
    scale = 1.0 / jnp.sqrt(jnp.float32(hs))
    wq_cat = jnp.transpose(params["wq"] * scale, (1, 0, 2)).reshape(C, H * hs)
    wk_cat = jnp.transpose(params["wk"], (1, 0, 2)).reshape(C, H * hs)
    wv_cat = jnp.transpose(params["wv"], (1, 0, 2)).reshape(C, H * hs)
    wkv = jnp.concatenate([wk_cat, wv_cat], axis=-1)                  # (C, 2*H*hs)
    wp_t = jnp.transpose(params["w_proj"])                            # (C, C) (in, out)
    b2 = params["b_proj"].reshape(1, C).astype(jnp.float32)

    # Wrapper-side cast: halves HBM->VMEM DMA bytes & removes per-step VPU casts.
    xc = x.astype(compute_dtype)
    wq_cat = wq_cat.astype(compute_dtype)
    wkv = wkv.astype(compute_dtype)
    wp_t = wp_t.astype(compute_dtype)

    def w_spec(shape):
        # Grid-invariant operands; optionally single-buffered (v7x VMEM headroom).
        if single_buffer_weights:
            return pl.BlockSpec(shape, lambda b, qi: (0, 0),
                                pipeline_mode=pl.Buffered(1))
        return pl.BlockSpec(shape, lambda b, qi: (0, 0))

    kernel = functools.partial(_mha_flash_kernel,
                               num_heads=H, head_size=hs,
                               q_tile=tq, kv_tile=tk,
                               compute_dtype=compute_dtype)

    return pl.pallas_call(
        kernel,
        out_shape=jax.ShapeDtypeStruct((B, T, C), x.dtype),
        grid_spec=pltpu.PrefetchScalarGridSpec(
            num_scalar_prefetch=0,
            grid=(B, nq),
            in_specs=[
                pl.BlockSpec((1, tq, C), lambda b, qi: (b, qi, 0)),   # q tile of x
                pl.BlockSpec((1, T, C), lambda b, qi: (b, 0, 0)),     # full x for K/V
                w_spec((C, H * hs)),                                  # Wq (pre-scaled)
                w_spec((C, 2 * H * hs)),                              # [Wk | Wv]
                w_spec((C, C)),                                       # Wp (in, out)
                w_spec((1, C)),                                       # bias
            ],
            out_specs=pl.BlockSpec((1, tq, C), lambda b, qi: (b, qi, 0)),
        ),
        compiler_params=pltpu.CompilerParams(
            dimension_semantics=("parallel", "parallel"),   # both TCs busy on v7x
            vmem_limit_bytes=32 * 1024 * 1024,
        ),
    )(xc, xc, wq_cat, wkv, wp_t, b2)


def init_params(key, num_heads, head_size, n_embd):
    kq, kk, kv, kp, kb = jax.random.split(key, 5)
    s = 0.02
    return {
        "wq": s * jax.random.normal(kq, (num_heads, n_embd, head_size), jnp.float32),
        "wk": s * jax.random.normal(kk, (num_heads, n_embd, head_size), jnp.float32),
        "wv": s * jax.random.normal(kv, (num_heads, n_embd, head_size), jnp.float32),
        "w_proj": s * jax.random.normal(kp, (n_embd, n_embd), jnp.float32),
        "b_proj": s * jax.random.normal(kb, (n_embd,), jnp.float32),
    }


# ------------------------------ reference (JAX) --------------------------------
def _reference(x, params):
    B, T, C = x.shape
    outs = []
    H = params["wq"].shape[0]
    for h in range(H):
        q = x @ params["wq"][h]
        k = x @ params["wk"][h]
        v = x @ params["wv"][h]
        wei = (q @ jnp.swapaxes(k, -2, -1)) / jnp.sqrt(jnp.float32(k.shape[-1]))
        mask = jnp.tril(jnp.ones((T, T), dtype=bool))
        wei = jnp.where(mask, wei, -jnp.inf)
        wei = jax.nn.softmax(wei, axis=-1)
        outs.append(wei @ v)
    cat = jnp.concatenate(outs, axis=-1)
    return cat @ params["w_proj"].T + params["b_proj"]


if __name__ == "__main__":
    # Small shapes consistent with the module structure; T split into 2 query
    # tiles so the KV-streamed / causally-pruned path is actually exercised.
    B, T, n_embd = 2, 16, 32
    num_heads, head_size = 4, 8
    q_tile = 8

    key = jax.random.PRNGKey(0)
    kx, kp = jax.random.split(key)
    x = jax.random.normal(kx, (B, T, n_embd), jnp.float32)
    params = init_params(kp, num_heads, head_size, n_embd)

    ref = _reference(x, params)

    # f32 compute path (exact, compared tightly against the reference).
    out = multi_head_attention(x, params, compute_dtype=jnp.float32, q_tile=q_tile)
    out = jax.block_until_ready(out)
    assert out.shape == (B, T, n_embd)
    # Tolerance accounts for the EUP approx reciprocal in softmax normalization.
    assert jnp.allclose(out, ref, atol=1e-3, rtol=1e-3), "f32 mismatch vs reference"

    # bf16 MXU-operand path (production setting per review), loose tolerance.
    out_bf16 = multi_head_attention(x, params, compute_dtype=jnp.bfloat16, q_tile=q_tile)
    out_bf16 = jax.block_until_ready(out_bf16)
    assert jnp.allclose(out_bf16, ref, atol=3e-2, rtol=3e-2), "bf16 mismatch vs reference"

    print("KERNEL_OK")
</pallas_src>

<mosaic_0001>
module attributes {stable_mosaic.version = 11 : i64} {
  func.func @_mha_flash_kernel(%arg0: i32, %arg1: i32, %arg2: memref<1x8x32xf32, #tpu.memory_space<vmem>>, %arg3: memref<1x16x32xf32, #tpu.memory_space<vmem>>, %arg4: memref<32x32xf32, #tpu.memory_space<vmem>>, %arg5: memref<32x64xf32, #tpu.memory_space<vmem>>, %arg6: memref<32x32xf32, #tpu.memory_space<vmem>>, %arg7: memref<1x32xf32, #tpu.memory_space<vmem>>, %arg8: memref<1x8x32xf32, #tpu.memory_space<vmem>>) attributes {dimension_semantics = [#tpu.dimension_semantics<parallel>, #tpu.dimension_semantics<parallel>], iteration_bounds = array<i64: 2, 2>, scalar_prefetch = 0 : i64, scratch_operands = 0 : i64, tpu.core_type = #tpu.core_type<tc>, window_params = [{transform_indices = @transform_0, window_bounds = array<i64: 1, 8, 32>}, {transform_indices = @transform_1, window_bounds = array<i64: 1, 16, 32>}, {pipeline_mode = #tpu.pipeline_mode<synchronous>, transform_indices = @transform_2, window_bounds = array<i64: 32, 32>}, {pipeline_mode = #tpu.pipeline_mode<synchronous>, transform_indices = @transform_3, window_bounds = array<i64: 32, 64>}, {pipeline_mode = #tpu.pipeline_mode<synchronous>, transform_indices = @transform_4, window_bounds = array<i64: 32, 32>}, {pipeline_mode = #tpu.pipeline_mode<synchronous>, transform_indices = @transform_5, window_bounds = array<i64: 1, 32>}, {transform_indices = @transform_6, window_bounds = array<i64: 1, 8, 32>}]} {
    %c0 = arith.constant 0 : index
    %c0_0 = arith.constant 0 : index
    %c0_1 = arith.constant 0 : index
    %0 = vector.load %arg2[%c0, %c0_0, %c0_1] : memref<1x8x32xf32, #tpu.memory_space<vmem>>, vector<1x8x32xf32>
    %1 = vector.shape_cast %0 : vector<1x8x32xf32> to vector<8x32xf32>
    %c0_2 = arith.constant 0 : index
    %c0_3 = arith.constant 0 : index
    %2 = vector.load %arg4[%c0_2, %c0_3] : memref<32x32xf32, #tpu.memory_space<vmem>>, vector<32x32xf32>
    %cst = arith.constant dense<0.000000e+00> : vector<8x32xf32>
    %3 = tpu.matmul %1, %2, %cst {dimension_numbers = #tpu.dot_dimension_numbers<[1], [0], [0], [1], [0, 0, 1, 1], [], []>} : vector<8x32xf32>, vector<32x32xf32>, vector<8x32xf32> -> vector<8x32xf32>
    %4 = vector.extract_strided_slice %3 {offsets = [0, 0], sizes = [8, 8], strides = [1, 1]} : vector<8x32xf32> to vector<8x8xf32>
    %5 = vector.extract_strided_slice %3 {offsets = [0, 8], sizes = [8, 8], strides = [1, 1]} : vector<8x32xf32> to vector<8x8xf32>
    %6 = vector.extract_strided_slice %3 {offsets = [0, 16], sizes = [8, 8], strides = [1, 1]} : vector<8x32xf32> to vector<8x8xf32>
    %7 = vector.extract_strided_slice %3 {offsets = [0, 24], sizes = [8, 8], strides = [1, 1]} : vector<8x32xf32> to vector<8x8xf32>
    %c8_i32 = arith.constant 8 : i32
    %8 = arith.muli %arg1, %c8_i32 : i32
    %9 = tpu.iota {dimensions = array<i32: 0>} : vector<8x8xi32>
    %10 = vector.broadcast %8 : i32 to vector<8x8xi32>
    %11 = arith.addi %10, %9 : vector<8x8xi32>
    %cst_4 = arith.constant -1.000000e+30 : f32
    %12 = vector.broadcast %cst_4 : f32 to vector<8x1xf32>
    %cst_5 = arith.constant -1.000000e+30 : f32
    %13 = vector.broadcast %cst_5 : f32 to vector<8x1xf32>
    %cst_6 = arith.constant -1.000000e+30 : f32
    %14 = vector.broadcast %cst_6 : f32 to vector<8x1xf32>
    %cst_7 = arith.constant -1.000000e+30 : f32
    %15 = vector.broadcast %cst_7 : f32 to vector<8x1xf32>
    %cst_8 = arith.constant 0.000000e+00 : f32
    %16 = vector.broadcast %cst_8 : f32 to vector<8x1xf32>
    %cst_9 = arith.constant 0.000000e+00 : f32
    %17 = vector.broadcast %cst_9 : f32 to vector<8x1xf32>
    %cst_10 = arith.constant 0.000000e+00 : f32
    %18 = vector.broadcast %cst_10 : f32 to vector<8x1xf32>
    %cst_11 = arith.constant 0.000000e+00 : f32
    %19 = vector.broadcast %cst_11 : f32 to vector<8x1xf32>
    %cst_12 = arith.constant 0.000000e+00 : f32
    %20 = vector.broadcast %cst_12 : f32 to vector<8x8xf32>
    %cst_13 = arith.constant 0.000000e+00 : f32
    %21 = vector.broadcast %cst_13 : f32 to vector<8x8xf32>
    %cst_14 = arith.constant 0.000000e+00 : f32
    %22 = vector.broadcast %cst_14 : f32 to vector<8x8xf32>
    %cst_15 = arith.constant 0.000000e+00 : f32
    %23 = vector.broadcast %cst_15 : f32 to vector<8x8xf32>
    %c1_i32 = arith.constant 1 : i32
    %24 = arith.addi %arg1, %c1_i32 : i32
    %cst_16 = arith.constant -1.000000e+30 : f32
    %c0_i32 = arith.constant 0 : i32
    %25 = arith.subi %24, %c0_i32 : i32
    %26 = arith.addi %c0_i32, %25 : i32
    %c1_i32_17 = arith.constant 1 : i32
    %27:12 = scf.for %arg9 = %c0_i32 to %26 step %c1_i32_17 iter_args(%arg10 = %12, %arg11 = %13, %arg12 = %14, %arg13 = %15, %arg14 = %16, %arg15 = %17, %arg16 = %18, %arg17 = %19, %arg18 = %20, %arg19 = %21, %arg20 = %22, %arg21 = %23) -> (vector<8x1xf32>, vector<8x1xf32>, vector<8x1xf32>, vector<8x1xf32>, vector<8x1xf32>, vector<8x1xf32>, vector<8x1xf32>, vector<8x1xf32>, vector<8x8xf32>, vector<8x8xf32>, vector<8x8xf32>, vector<8x8xf32>)  : i32 {
      %c8_i32_32 = arith.constant 8 : i32
      %57 = arith.muli %arg9, %c8_i32_32 : i32
      %58 = tpu.assume_multiple %57, 8 : i32
      %c0_33 = arith.constant 0 : index
      %59 = arith.index_cast %58 : i32 to index
      %c0_34 = arith.constant 0 : index
      %60 = vector.load %arg3[%c0_33, %59, %c0_34] : memref<1x16x32xf32, #tpu.memory_space<vmem>>, vector<1x8x32xf32>
      %61 = vector.shape_cast %60 : vector<1x8x32xf32> to vector<8x32xf32>
      %c0_35 = arith.constant 0 : index
      %c0_36 = arith.constant 0 : index
      %62 = vector.load %arg5[%c0_35, %c0_36] : memref<32x64xf32, #tpu.memory_space<vmem>>, vector<32x64xf32>
      %cst_37 = arith.constant dense<0.000000e+00> : vector<8x64xf32>
      %63 = tpu.matmul %61, %62, %cst_37 {dimension_numbers = #tpu.dot_dimension_numbers<[1], [0], [0], [1], [0, 0, 1, 1], [], []>} : vector<8x32xf32>, vector<32x64xf32>, vector<8x64xf32> -> vector<8x64xf32>
      %64 = tpu.iota {dimensions = array<i32: 1>} : vector<8x8xi32>
      %65 = vector.broadcast %58 : i32 to vector<8x8xi32>
      %66 = arith.addi %65, %64 : vector<8x8xi32>
      %67 = arith.cmpi sle, %66, %11 : vector<8x8xi32>
      %68 = vector.extract_strided_slice %63 {offsets = [0, 0], sizes = [8, 8], strides = [1, 1]} : vector<8x64xf32> to vector<8x8xf32>
      %69 = vector.extract_strided_slice %63 {offsets = [0, 32], sizes = [8, 8], strides = [1, 1]} : vector<8x64xf32> to vector<8x8xf32>
      %cst_38 = arith.constant dense<0.000000e+00> : vector<8x8xf32>
      %70 = tpu.matmul %4, %68, %cst_38 {dimension_numbers = #tpu.dot_dimension_numbers<[1], [1], [0], [0], [0, 0, 1, 0], [], []>} : vector<8x8xf32>, vector<8x8xf32>, vector<8x8xf32> -> vector<8x8xf32>
      %71 = vector.broadcast %cst_16 : f32 to vector<8x8xf32>
      %72 = arith.select %67, %70, %71 : vector<8x8xi1>, vector<8x8xf32>
      %cst_39 = arith.constant dense<0xFF800000> : vector<8xf32>
      %73 = vector.multi_reduction <maximumf>, %72, %cst_39 [1] : vector<8x8xf32> to vector<8xf32>
      %74 = vector.shape_cast %73 : vector<8xf32> to vector<8x1xf32>
      %75 = arith.maximumf %arg10, %74 : vector<8x1xf32>
      %76 = arith.subf %arg10, %75 : vector<8x1xf32>
      %77 = math.exp %76 : vector<8x1xf32>
      %78 = vector.broadcast %75 : vector<8x1xf32> to vector<8x8xf32>
      %79 = arith.subf %72, %78 : vector<8x8xf32>
      %80 = math.exp %79 : vector<8x8xf32>
      %81 = arith.mulf %77, %arg14 : vector<8x1xf32>
      %cst_40 = arith.constant dense<0.000000e+00> : vector<8xf32>
      %82 = vector.multi_reduction <add>, %80, %cst_40 [1] : vector<8x8xf32> to vector<8xf32>
      %83 = vector.shape_cast %82 : vector<8xf32> to vector<8x1xf32>
      %84 = arith.addf %81, %83 : vector<8x1xf32>
      %85 = vector.broadcast %77 : vector<8x1xf32> to vector<8x8xf32>
      %86 = arith.mulf %85, %arg18 : vector<8x8xf32>
      %cst_41 = arith.constant dense<0.000000e+00> : vector<8x8xf32>
      %87 = tpu.matmul %80, %69, %cst_41 {dimension_numbers = #tpu.dot_dimension_numbers<[1], [0], [0], [1], [0, 0, 1, 1], [], []>} : vector<8x8xf32>, vector<8x8xf32>, vector<8x8xf32> -> vector<8x8xf32>
      %88 = arith.addf %86, %87 : vector<8x8xf32>
      %89 = vector.extract_strided_slice %63 {offsets = [0, 8], sizes = [8, 8], strides = [1, 1]} : vector<8x64xf32> to vector<8x8xf32>
      %90 = vector.extract_strided_slice %63 {offsets = [0, 40], sizes = [8, 8], strides = [1, 1]} : vector<8x64xf32> to vector<8x8xf32>
      %cst_42 = arith.constant dense<0.000000e+00> : vector<8x8xf32>
      %91 = tpu.matmul %5, %89, %cst_42 {dimension_numbers = #tpu.dot_dimension_numbers<[1], [1], [0], [0], [0, 0, 1, 0], [], []>} : vector<8x8xf32>, vector<8x8xf32>, vector<8x8xf32> -> vector<8x8xf32>
      %92 = vector.broadcast %cst_16 : f32 to vector<8x8xf32>
      %93 = arith.select %67, %91, %92 : vector<8x8xi1>, vector<8x8xf32>
      %cst_43 = arith.constant dense<0xFF800000> : vector<8xf32>
      %94 = vector.multi_reduction <maximumf>, %93, %cst_43 [1] : vector<8x8xf32> to vector<8xf32>
      %95 = vector.shape_cast %94 : vector<8xf32> to vector<8x1xf32>
      %96 = arith.maximumf %arg11, %95 : vector<8x1xf32>
      %97 = arith.subf %arg11, %96 : vector<8x1xf32>
      %98 = math.exp %97 : vector<8x1xf32>
      %99 = vector.broadcast %96 : vector<8x1xf32> to vector<8x8xf32>
      %100 = arith.subf %93, %99 : vector<8x8xf32>
      %101 = math.exp %100 : vector<8x8xf32>
      %102 = arith.mulf %98, %arg15 : vector<8x1xf32>
      %cst_44 = arith.constant dense<0.000000e+00> : vector<8xf32>
      %103 = vector.multi_reduction <add>, %101, %cst_44 [1] : vector<8x8xf32> to vector<8xf32>
      %104 = vector.shape_cast %103 : vector<8xf32> to vector<8x1xf32>
      %105 = arith.addf %102, %104 : vector<8x1xf32>
      %106 = vector.broadcast %98 : vector<8x1xf32> to vector<8x8xf32>
      %107 = arith.mulf %106, %arg19 : vector<8x8xf32>
      %cst_45 = arith.constant dense<0.000000e+00> : vector<8x8xf32>
      %108 = tpu.matmul %101, %90, %cst_45 {dimension_numbers = #tpu.dot_dimension_numbers<[1], [0], [0], [1], [0, 0, 1, 1], [], []>} : vector<8x8xf32>, vector<8x8xf32>, vector<8x8xf32> -> vector<8x8xf32>
      %109 = arith.addf %107, %108 : vector<8x8xf32>
      %110 = vector.extract_strided_slice %63 {offsets = [0, 16], sizes = [8, 8], strides = [1, 1]} : vector<8x64xf32> to vector<8x8xf32>
      %111 = vector.extract_strided_slice %63 {offsets = [0, 48], sizes = [8, 8], strides = [1, 1]} : vector<8x64xf32> to vector<8x8xf32>
      %cst_46 = arith.constant dense<0.000000e+00> : vector<8x8xf32>
      %112 = tpu.matmul %6, %110, %cst_46 {dimension_numbers = #tpu.dot_dimension_numbers<[1], [1], [0], [0], [0, 0, 1, 0], [], []>} : vector<8x8xf32>, vector<8x8xf32>, vector<8x8xf32> -> vector<8x8xf32>
      %113 = vector.broadcast %cst_16 : f32 to vector<8x8xf32>
      %114 = arith.select %67, %112, %113 : vector<8x8xi1>, vector<8x8xf32>
      %cst_47 = arith.constant dense<0xFF800000> : vector<8xf32>
      %115 = vector.multi_reduction <maximumf>, %114, %cst_47 [1] : vector<8x8xf32> to vector<8xf32>
      %116 = vector.shape_cast %115 : vector<8xf32> to vector<8x1xf32>
      %117 = arith.maximumf %arg12, %116 : vector<8x1xf32>
      %118 = arith.subf %arg12, %117 : vector<8x1xf32>
      %119 = math.exp %118 : vector<8x1xf32>
      %120 = vector.broadcast %117 : vector<8x1xf32> to vector<8x8xf32>
      %121 = arith.subf %114, %120 : vector<8x8xf32>
      %122 = math.exp %121 : vector<8x8xf32>
      %123 = arith.mulf %119, %arg16 : vector<8x1xf32>
      %cst_48 = arith.constant dense<0.000000e+00> : vector<8xf32>
      %124 = vector.multi_reduction <add>, %122, %cst_48 [1] : vector<8x8xf32> to vector<8xf32>
      %125 = vector.shape_cast %124 : vector<8xf32> to vector<8x1xf32>
      %126 = arith.addf %123, %125 : vector<8x1xf32>
      %127 = vector.broadcast %119 : vector<8x1xf32> to vector<8x8xf32>
      %128 = arith.mulf %127, %arg20 : vector<8x8xf32>
      %cst_49 = arith.constant dense<0.000000e+00> : vector<8x8xf32>
      %129 = tpu.matmul %122, %111, %cst_49 {dimension_numbers = #tpu.dot_dimension_numbers<[1], [0], [0], [1], [0, 0, 1, 1], [], []>} : vector<8x8xf32>, vector<8x8xf32>, vector<8x8xf32> -> vector<8x8xf32>
      %130 = arith.addf %128, %129 : vector<8x8xf32>
      %131 = vector.extract_strided_slice %63 {offsets = [0, 24], sizes = [8, 8], strides = [1, 1]} : vector<8x64xf32> to vector<8x8xf32>
      %132 = vector.extract_strided_slice %63 {offsets = [0, 56], sizes = [8, 8], strides = [1, 1]} : vector<8x64xf32> to vector<8x8xf32>
      %cst_50 = arith.constant dense<0.000000e+00> : vector<8x8xf32>
      %133 = tpu.matmul %7, %131, %cst_50 {dimension_numbers = #tpu.dot_dimension_numbers<[1], [1], [0], [0], [0, 0, 1, 0], [], []>} : vector<8x8xf32>, vector<8x8xf32>, vector<8x8xf32> -> vector<8x8xf32>
      %134 = vector.broadcast %cst_16 : f32 to vector<8x8xf32>
      %135 = arith.select %67, %133, %134 : vector<8x8xi1>, vector<8x8xf32>
      %cst_51 = arith.constant dense<0xFF800000> : vector<8xf32>
      %136 = vector.multi_reduction <maximumf>, %135, %cst_51 [1] : vector<8x8xf32> to vector<8xf32>
      %137 = vector.shape_cast %136 : vector<8xf32> to vector<8x1xf32>
      %138 = arith.maximumf %arg13, %137 : vector<8x1xf32>
      %139 = arith.subf %arg13, %138 : vector<8x1xf32>
      %140 = math.exp %139 : vector<8x1xf32>
      %141 = vector.broadcast %138 : vector<8x1xf32> to vector<8x8xf32>
      %142 = arith.subf %135, %141 : vector<8x8xf32>
      %143 = math.exp %142 : vector<8x8xf32>
      %144 = arith.mulf %140, %arg17 : vector<8x1xf32>
      %cst_52 = arith.constant dense<0.000000e+00> : vector<8xf32>
      %145 = vector.multi_reduction <add>, %143, %cst_52 [1] : vector<8x8xf32> to vector<8xf32>
      %146 = vector.shape_cast %145 : vector<8xf32> to vector<8x1xf32>
      %147 = arith.addf %144, %146 : vector<8x1xf32>
      %148 = vector.broadcast %140 : vector<8x1xf32> to vector<8x8xf32>
      %149 = arith.mulf %148, %arg21 : vector<8x8xf32>
      %cst_53 = arith.constant dense<0.000000e+00> : vector<8x8xf32>
      %150 = tpu.matmul %143, %132, %cst_53 {dimension_numbers = #tpu.dot_dimension_numbers<[1], [0], [0], [1], [0, 0, 1, 1], [], []>} : vector<8x8xf32>, vector<8x8xf32>, vector<8x8xf32> -> vector<8x8xf32>
      %151 = arith.addf %149, %150 : vector<8x8xf32>
      scf.yield %75, %96, %117, %138, %84, %105, %126, %147, %88, %109, %130, %151 : vector<8x1xf32>, vector<8x1xf32>, vector<8x1xf32>, vector<8x1xf32>, vector<8x1xf32>, vector<8x1xf32>, vector<8x1xf32>, vector<8x1xf32>, vector<8x8xf32>, vector<8x8xf32>, vector<8x8xf32>, vector<8x8xf32>
    }
    %c0_18 = arith.constant 0 : index
    %c0_19 = arith.constant 0 : index
    %28 = vector.load %arg7[%c0_18, %c0_19] : memref<1x32xf32, #tpu.memory_space<vmem>>, vector<1x32xf32>
    %29 = tpu.reciprocal %27#4 {approx = true} : vector<8x1xf32> -> vector<8x1xf32>
    %30 = vector.broadcast %29 : vector<8x1xf32> to vector<8x8xf32>
    %31 = arith.mulf %27#8, %30 : vector<8x8xf32>
    %c0_20 = arith.constant 0 : index
    %c0_21 = arith.constant 0 : index
    %32 = vector.load %arg6[%c0_20, %c0_21] : memref<32x32xf32, #tpu.memory_space<vmem>>, vector<8x32xf32>
    %cst_22 = arith.constant dense<0.000000e+00> : vector<8x32xf32>
    %33 = tpu.matmul %31, %32, %cst_22 {dimension_numbers = #tpu.dot_dimension_numbers<[1], [0], [0], [1], [0, 0, 1, 1], [], []>} : vector<8x8xf32>, vector<8x32xf32>, vector<8x32xf32> -> vector<8x32xf32>
    %34 = vector.broadcast %28 : vector<1x32xf32> to vector<8x32xf32>
    %35 = arith.addf %34, %33 : vector<8x32xf32>
    %36 = tpu.reciprocal %27#5 {approx = true} : vector<8x1xf32> -> vector<8x1xf32>
    %37 = vector.broadcast %36 : vector<8x1xf32> to vector<8x8xf32>
    %38 = arith.mulf %27#9, %37 : vector<8x8xf32>
    %c8 = arith.constant 8 : index
    %c0_23 = arith.constant 0 : index
    %39 = vector.load %arg6[%c8, %c0_23] : memref<32x32xf32, #tpu.memory_space<vmem>>, vector<8x32xf32>
    %cst_24 = arith.constant dense<0.000000e+00> : vector<8x32xf32>
    %40 = tpu.matmul %38, %39, %cst_24 {dimension_numbers = #tpu.dot_dimension_numbers<[1], [0], [0], [1], [0, 0, 1, 1], [], []>} : vector<8x8xf32>, vector<8x32xf32>, vector<8x32xf32> -> vector<8x32xf32>
    %41 = arith.addf %35, %40 : vector<8x32xf32>
    %42 = tpu.reciprocal %27#6 {approx = true} : vector<8x1xf32> -> vector<8x1xf32>
    %43 = vector.broadcast %42 : vector<8x1xf32> to vector<8x8xf32>
    %44 = arith.mulf %27#10, %43 : vector<8x8xf32>
    %c16 = arith.constant 16 : index
    %c0_25 = arith.constant 0 : index
    %45 = vector.load %arg6[%c16, %c0_25] : memref<32x32xf32, #tpu.memory_space<vmem>>, vector<8x32xf32>
    %cst_26 = arith.constant dense<0.000000e+00> : vector<8x32xf32>
    %46 = tpu.matmul %44, %45, %cst_26 {dimension_numbers = #tpu.dot_dimension_numbers<[1], [0], [0], [1], [0, 0, 1, 1], [], []>} : vector<8x8xf32>, vector<8x32xf32>, vector<8x32xf32> -> vector<8x32xf32>
    %47 = arith.addf %41, %46 : vector<8x32xf32>
    %48 = tpu.reciprocal %27#7 {approx = true} : vector<8x1xf32> -> vector<8x1xf32>
    %49 = vector.broadcast %48 : vector<8x1xf32> to vector<8x8xf32>
    %50 = arith.mulf %27#11, %49 : vector<8x8xf32>
    %c24 = arith.constant 24 : index
    %c0_27 = arith.constant 0 : index
    %51 = vector.load %arg6[%c24, %c0_27] : memref<32x32xf32, #tpu.memory_space<vmem>>, vector<8x32xf32>
    %cst_28 = arith.constant dense<0.000000e+00> : vector<8x32xf32>
    %52 = tpu.matmul %50, %51, %cst_28 {dimension_numbers = #tpu.dot_dimension_numbers<[1], [0], [0], [1], [0, 0, 1, 1], [], []>} : vector<8x8xf32>, vector<8x32xf32>, vector<8x32xf32> -> vector<8x32xf32>
    %53 = arith.addf %47, %52 : vector<8x32xf32>
    %c0_29 = arith.constant 0 : index
    %c0_30 = arith.constant 0 : index
    %c0_31 = arith.constant 0 : index
    %54 = vector.load %arg8[%c0_29, %c0_30, %c0_31] : memref<1x8x32xf32, #tpu.memory_space<vmem>>, vector<1x8x32xf32>
    %55 = vector.shape_cast %54 : vector<1x8x32xf32> to vector<8x32xf32>
    %56 = vector.shape_cast %53 : vector<8x32xf32> to vector<1x8x32xf32>
    tpu.vector_store %arg8[%c0_29, %c0_30, %c0_31], %56 {strides = array<i32>} : memref<1x8x32xf32, #tpu.memory_space<vmem>>, vector<1x8x32xf32>,
    return
  }
  func.func @transform_0(%arg0: i32, %arg1: i32) -> (i32, i32, i32) {
    %c0_i32 = arith.constant 0 : i32
    %c0_i32_0 = arith.constant 0 : i32
    return %arg0, %arg1, %c0_i32 : i32, i32, i32
  }
  func.func @transform_1(%arg0: i32, %arg1: i32) -> (i32, i32, i32) {
    %c0_i32 = arith.constant 0 : i32
    %c0_i32_0 = arith.constant 0 : i32
    %c0_i32_1 = arith.constant 0 : i32
    return %arg0, %c0_i32, %c0_i32_0 : i32, i32, i32
  }
  func.func @transform_2(%arg0: i32, %arg1: i32) -> (i32, i32) {
    %c0_i32 = arith.constant 0 : i32
    %c0_i32_0 = arith.constant 0 : i32
    %c0_i32_1 = arith.constant 0 : i32
    return %c0_i32, %c0_i32_0 : i32, i32
  }
  func.func @transform_3(%arg0: i32, %arg1: i32) -> (i32, i32) {
    %c0_i32 = arith.constant 0 : i32
    %c0_i32_0 = arith.constant 0 : i32
    %c0_i32_1 = arith.constant 0 : i32
    return %c0_i32, %c0_i32_0 : i32, i32
  }
  func.func @transform_4(%arg0: i32, %arg1: i32) -> (i32, i32) {
    %c0_i32 = arith.constant 0 : i32
    %c0_i32_0 = arith.constant 0 : i32
    %c0_i32_1 = arith.constant 0 : i32
    return %c0_i32, %c0_i32_0 : i32, i32
  }
  func.func @transform_5(%arg0: i32, %arg1: i32) -> (i32, i32) {
    %c0_i32 = arith.constant 0 : i32
    %c0_i32_0 = arith.constant 0 : i32
    %c0_i32_1 = arith.constant 0 : i32
    return %c0_i32, %c0_i32_0 : i32, i32
  }
  func.func @transform_6(%arg0: i32, %arg1: i32) -> (i32, i32, i32) {
    %c0_i32 = arith.constant 0 : i32
    %c0_i32_0 = arith.constant 0 : i32
    return %arg0, %arg1, %c0_i32 : i32, i32, i32
  }
}

</mosaic_0001>

<llo_original>
// kernel: tpu_custom_call.1
$region0: #{tpu_custom_call.1}
  #allocation0 [shape = 'u32[]', space=smem, size = 0x4, offset = 0x4, fixed_abs, tag = 'smem constant byte address 0x4 - core index']
  #allocation1 [shape = 'u32[144,128]{1,0:T(1,128)}', space=vmem, size = 0x12000, scoped, tag = 'internal scratch']
  %s0 = inlined_call_operand.hbm [shape: f32[2,16,32], index: 0, kind: input, shape index: {}]
  %s1 = inlined_call_operand.hbm [shape: f32[2,16,32], index: 1, kind: input, shape index: {}]
  %s2 = inlined_call_operand.hbm [shape: f32[32,32], index: 2, kind: input, shape index: {}]
  %s3 = inlined_call_operand.hbm [shape: f32[32,64], index: 3, kind: input, shape index: {}]
  %s4 = inlined_call_operand.hbm [shape: f32[32,32], index: 4, kind: input, shape index: {}]
  %s5 = inlined_call_operand.vmem [shape: f32[1,32], index: 5, kind: input, shape index: {}]
  %s6 = inlined_call_operand.hbm [shape: f32[2,16,32], index: 6, kind: output, shape index: {}]
  %s7 = sld [smem:[#allocation0]]
  $region84: #{tpu_custom_call.1} parent=0
    _
  %s9 = ssub.s32 1, %s7
  %s10 = scalar_select 0, %s9, %s7
  $region1: #{tpu_custom_call.1} parent=0
    #allocation2 [shape = 'u8[8192]{0}', space=vmem, size = 0x2000, scoped, tag = 'input window, operand 0']
    #allocation3 [shape = 's32[2]{0}', space=sflag, size = 0x8, scoped, tag = 'scoped memory for tpu_custom_call.1']
    #allocation4 [shape = 's32[2]{0}', space=sflag, size = 0x8, scoped, tag = 'scoped memory for tpu_custom_call.1']
    #allocation5 [shape = 'u8[16384]{0}', space=vmem, size = 0x4000, scoped, tag = 'input window, operand 1']
    #allocation6 [shape = 's32[2]{0}', space=sflag, size = 0x8, scoped, tag = 'scoped memory for tpu_custom_call.1']
    #allocation7 [shape = 'u8[16384]{0}', space=vmem, size = 0x4000, scoped, tag = 'input window, operand 2, single buffered']
    #allocation8 [shape = 'u8[16384]{0}', space=vmem, size = 0x4000, scoped, tag = 'input window, operand 3, single buffered']
    #allocation9 [shape = 's32[1]{0}', space=sflag, size = 0x4, scoped, tag = 'scoped memory for tpu_custom_call.1']
    #allocation10 [shape = 'u8[16384]{0}', space=vmem, size = 0x4000, scoped, tag = 'input window, operand 4, single buffered']
    #allocation11 [shape = 'u8[8192]{0}', space=vmem, size = 0x2000, scoped, tag = 'output window, operand 0']
    %11 = vsyncpa [#allocation3], 0
    %s12 = scalar_lea.sflag [#allocation3], 1
    %13 = vsyncpa %s12, 0
    %14 = vsyncpa [#allocation6], 0
    %s15 = scalar_lea.sflag [#allocation6], 1
    %16 = vsyncpa %s15, 0
    %17 = vsyncpa [#allocation9], 0
    %18 = vsyncpa [#allocation4], 0
    %s19 = scalar_lea.sflag [#allocation4], 1
    %20 = vsyncpa %s19, 0
    loop: start=0, step=1, limit=6
    $region2: #{tpu_custom_call.1} parent=1 // loop_pre_header
      _
    $region3: #{tpu_custom_call.1} parent=1 // loop_header
      %s22 = sphi 0, %s26
      %p23 = scmp.ge.s32.totalorder %s22, 6
      %s29 = sphi 0, %s41
      %s30 = sphi 0, %s37
      %s31 = sphi 0, %s29
      %s32 = sphi 0, %s30
      %s33 = sphi 0, %s31
      %s34 = sphi 0, %s32
      %s46 = sphi 0, %s48
      %s49 = sphi 0, %s46
      %s50 = sphi 0, %s49
      %s66 = sphi 0, %s50
      %s72 = sphi 0, %s74
      %s75 = sphi 0, %s72
      %s76 = sphi 0, %s75
      %s92 = sphi 0, %s76
      %s96 = sphi 0, %s96
      %s98 = sphi 0, %s96
      %s99 = sphi 0, %s98
      %s113 = sphi 0, %s99
      %s117 = sphi 0, %s117
      %s119 = sphi 0, %s117
      %s120 = sphi 0, %s119
      %s134 = sphi 0, %s120
      %s138 = sphi 0, %s138
      %s140 = sphi 0, %s138
      %s141 = sphi 0, %s140
      %s155 = sphi 0, %s141
      %s159 = sphi 0, %s159
      %s161 = sphi 0, %s159
      %s162 = sphi 0, %s161
      %s176 = sphi 0, %s162
      %s184 = sphi 0, %s186
      %s187 = sphi 0, %s184
      %s188 = sphi 0, %s187
      %s204 = sphi 0, %s188
    $region4: #{tpu_custom_call.1} parent=1 // loop_header_branch
      %25 = sbr.rel (%p23) target = $region8
    $region5: #{tpu_custom_call.1} parent=1 // loop_body
      %s27 = ssub.s32 %s22, 1
      %s28 = ssub.s32 %s22, 2
      %s35 = sadd.s32 1, %s30
      %p36 = scmp.ge.s32.totalorder %s35, 2
      %s37 = scalar_select %p36, 0, %s35
      %s38 = sadd.s32 1, %s29
      %s39 = scalar_select %p36, %s38, %s29
      %p40 = scmp.ge.s32.totalorder %s39, 2
      %s41 = scalar_select %p40, 0, %s39
      %s42 = ssub.s32 %s29, %s41
      %s43 = ssub.s32 %s30, %s37
      %s44 = sor.u32 %s42, %s43
      %p45 = scmp.eq.s32.totalorder %s44, 0
      %s47 = sadd.s32 %s46, 1
      %s48 = scalar_select %p45, %s46, %s47
      %p51 = pneg %p45
      %p52 = scmp.eq.s32.totalorder %s22, 3
      %p53 = por %p51, %p52
      %p54 = scmp.ne.s32.totalorder %s46, %s49
      %p55 = scmp.eq.s32.totalorder %s22, 0
      %p56 = por %p54, %p55
      %p57 = scmp.ne.s32.totalorder %s46, %s49
      %p58 = scmp.eq.s32.totalorder %s27, 3
      %p59 = por %p57, %p58
      %p60 = scmp.ne.s32.totalorder %s49, %s50
      %p61 = scmp.eq.s32.totalorder %s27, 0
      %p62 = por %p60, %p61
      %p63 = scmp.ne.s32.totalorder %s49, %s50
      %p64 = scmp.eq.s32.totalorder %s28, 3
      %p65 = por %p63, %p64
      %p67 = scmp.ne.s32.totalorder %s50, %s66
      %p68 = scmp.eq.s32.totalorder %s28, 0
      %p69 = por %p67, %p68
      %s70 = ssub.s32 %s29, %s41
      %p71 = scmp.eq.s32.totalorder %s70, 0
      %s73 = sadd.s32 %s72, 1
      %s74 = scalar_select %p71, %s72, %s73
      %p77 = pneg %p71
      %p78 = scmp.eq.s32.totalorder %s22, 3
      %p79 = por %p77, %p78
      %p80 = scmp.ne.s32.totalorder %s72, %s75
      %p81 = scmp.eq.s32.totalorder %s22, 0
      %p82 = por %p80, %p81
      %p83 = scmp.ne.s32.totalorder %s72, %s75
      %p84 = scmp.eq.s32.totalorder %s27, 3
      %p85 = por %p83, %p84
      %p86 = scmp.ne.s32.totalorder %s75, %s76
      %p87 = scmp.eq.s32.totalorder %s27, 0
      %p88 = por %p86, %p87
      %p89 = scmp.ne.s32.totalorder %s75, %s76
      %p90 = scmp.eq.s32.totalorder %s28, 3
      %p91 = por %p89, %p90
      %p93 = scmp.ne.s32.totalorder %s76, %s92
      %p94 = scmp.eq.s32.totalorder %s28, 0
      %p95 = por %p93, %p94
      %s97 = sadd.s32 %s96, 1
      %p100 = scmp.eq.s32.totalorder %s22, 3
      %p101 = scmp.ne.s32.totalorder %s96, %s98
      %p102 = scmp.eq.s32.totalorder %s22, 0
      %p103 = por %p101, %p102
      %p104 = scmp.ne.s32.totalorder %s96, %s98
      %p105 = scmp.eq.s32.totalorder %s27, 3
      %p106 = por %p104, %p105
      %p107 = scmp.ne.s32.totalorder %s98, %s99
      %p108 = scmp.eq.s32.totalorder %s27, 0
      %p109 = por %p107, %p108
      %p110 = scmp.ne.s32.totalorder %s98, %s99
      %p111 = scmp.eq.s32.totalorder %s28, 3
      %p112 = por %p110, %p111
      %p114 = scmp.ne.s32.totalorder %s99, %s113
      %p115 = scmp.eq.s32.totalorder %s28, 0
      %p116 = por %p114, %p115
      %s118 = sadd.s32 %s117, 1
      %p121 = scmp.eq.s32.totalorder %s22, 3
      %p122 = scmp.ne.s32.totalorder %s117, %s119
      %p123 = scmp.eq.s32.totalorder %s22, 0
      %p124 = por %p122, %p123
      %p125 = scmp.ne.s32.totalorder %s117, %s119
      %p126 = scmp.eq.s32.totalorder %s27, 3
      %p127 = por %p125, %p126
      %p128 = scmp.ne.s32.totalorder %s119, %s120
      %p129 = scmp.eq.s32.totalorder %s27, 0
      %p130 = por %p128, %p129
      %p131 = scmp.ne.s32.totalorder %s119, %s120
      %p132 = scmp.eq.s32.totalorder %s28, 3
      %p133 = por %p131, %p132
      %p135 = scmp.ne.s32.totalorder %s120, %s134
      %p136 = scmp.eq.s32.totalorder %s28, 0
      %p137 = por %p135, %p136
      %s139 = sadd.s32 %s138, 1
      %p142 = scmp.eq.s32.totalorder %s22, 3
      %p143 = scmp.ne.s32.totalorder %s138, %s140
      %p144 = scmp.eq.s32.totalorder %s22, 0
      %p145 = por %p143, %p144
      %p146 = scmp.ne.s32.totalorder %s138, %s140
      %p147 = scmp.eq.s32.totalorder %s27, 3
      %p148 = por %p146, %p147
      %p149 = scmp.ne.s32.totalorder %s140, %s141
      %p150 = scmp.eq.s32.totalorder %s27, 0
      %p151 = por %p149, %p150
      %p152 = scmp.ne.s32.totalorder %s140, %s141
      %p153 = scmp.eq.s32.totalorder %s28, 3
      %p154 = por %p152, %p153
      %p156 = scmp.ne.s32.totalorder %s141, %s155
      %p157 = scmp.eq.s32.totalorder %s28, 0
      %p158 = por %p156, %p157
      %s160 = sadd.s32 %s159, 1
      %p163 = scmp.eq.s32.totalorder %s22, 3
      %p164 = scmp.ne.s32.totalorder %s159, %s161
      %p165 = scmp.eq.s32.totalorder %s22, 0
      %p166 = por %p164, %p165
      %p167 = scmp.ne.s32.totalorder %s159, %s161
      %p168 = scmp.eq.s32.totalorder %s27, 3
      %p169 = por %p167, %p168
      %p170 = scmp.ne.s32.totalorder %s161, %s162
      %p171 = scmp.eq.s32.totalorder %s27, 0
      %p172 = por %p170, %p171
      %p173 = scmp.ne.s32.totalorder %s161, %s162
      %p174 = scmp.eq.s32.totalorder %s28, 3
      %p175 = por %p173, %p174
      %p177 = scmp.ne.s32.totalorder %s162, %s176
      %p178 = scmp.eq.s32.totalorder %s28, 0
      %p179 = por %p177, %p178
      %s180 = ssub.s32 %s29, %s41
      %s181 = ssub.s32 %s30, %s37
      %s182 = sor.u32 %s180, %s181
      %p183 = scmp.eq.s32.totalorder %s182, 0
      %s185 = sadd.s32 %s184, 1
      %s186 = scalar_select %p183, %s184, %s185
      %p189 = pneg %p183
      %p190 = scmp.eq.s32.totalorder %s22, 3
      %p191 = por %p189, %p190
      %p192 = scmp.ne.s32.totalorder %s184, %s187
      %p193 = scmp.eq.s32.totalorder %s22, 0
      %p194 = por %p192, %p193
      %p195 = scmp.ne.s32.totalorder %s184, %s187
      %p196 = scmp.eq.s32.totalorder %s27, 3
      %p197 = por %p195, %p196
      %p198 = scmp.ne.s32.totalorder %s187, %s188
      %p199 = scmp.eq.s32.totalorder %s27, 0
      %p200 = por %p198, %p199
      %p201 = scmp.ne.s32.totalorder %s187, %s188
      %p202 = scmp.eq.s32.totalorder %s28, 3
      %p203 = por %p201, %p202
      %p205 = scmp.ne.s32.totalorder %s188, %s204
      %p206 = scmp.eq.s32.totalorder %s28, 0
      %p207 = por %p205, %p206
      %p208 = scmp.le.s32.totalorder 1, %s22
      %p209 = scmp.lt.s32.totalorder %s22, 5
      %p210 = pnand %p208, %p209
      %p211 = pneg %p210
      // Predicated region
      $region9: #{tpu_custom_call.1} parent=5 // pred_check
        _
      $region10: #{tpu_custom_call.1} parent=5 // pred_check_branch
        %213 = sbr.rel (%p210) target = $region12
      $region11: #{tpu_custom_call.1} parent=5 // pred_region
        %s214 = ssub.s32 %s22, 1
        // Predicated region
        $region13: #{tpu_custom_call.1} parent=11 // pred_check
          %p215 = pneg %p109
        $region14: #{tpu_custom_call.1} parent=11 // pred_check_branch
          %217 = sbr.rel (%p215) target = $region16
        $region15: #{tpu_custom_call.1} parent=11 // pred_region
          %s219 = ssub.s32 512, 512
          %220 = vsyncadd [#allocation6], %s219
          %s221 = sshll.u32 [#allocation7], 4
          %s222 = int_to_ptr.vmem [resolvable:$true] %s221
          %227 = dma.hbm_to_vmem [thread:$0]  %s2, 512, %s222, [#allocation6], 128, 128, 8
        $region16: #{tpu_custom_call.1} parent=11 // pred_fallthru
          _
        // Predicated region
        $region17: #{tpu_custom_call.1} parent=11 // pred_check
          %p228 = pneg %p130
        $region18: #{tpu_custom_call.1} parent=11 // pred_check_branch
          %230 = sbr.rel (%p228) target = $region20
        $region19: #{tpu_custom_call.1} parent=11 // pred_region
          %s232 = ssub.s32 512, 512
          %233 = vsyncadd [#allocation9], %s232
          %s234 = sshll.u32 [#allocation8], 4
          %s235 = int_to_ptr.vmem [resolvable:$true] %s234
          %240 = dma.hbm_to_vmem [thread:$0]  %s3, 512, %s235, [#allocation9], 128, 128, 8
        $region20: #{tpu_custom_call.1} parent=11 // pred_fallthru
          _
        // Predicated region
        $region21: #{tpu_custom_call.1} parent=11 // pred_check
          %p241 = pneg %p151
        $region22: #{tpu_custom_call.1} parent=11 // pred_check_branch
          %243 = sbr.rel (%p241) target = $region24
        $region23: #{tpu_custom_call.1} parent=11 // pred_region
          %s245 = ssub.s32 512, 512
          %246 = vsyncadd [#allocation9], %s245
          %s247 = sshll.u32 [#allocation10], 4
          %s248 = int_to_ptr.vmem [resolvable:$true] %s247
          %253 = dma.hbm_to_vmem [thread:$0]  %s4, 512, %s248, [#allocation9], 128, 128, 8
        $region24: #{tpu_custom_call.1} parent=11 // pred_fallthru
          _
        // Predicated region
        $region25: #{tpu_custom_call.1} parent=11 // pred_check
          %p254 = pneg %p172
        $region26: #{tpu_custom_call.1} parent=11 // pred_check_branch
          %256 = sbr.rel (%p254) target = $region28
        $region27: #{tpu_custom_call.1} parent=11 // pred_region
          _
        $region28: #{tpu_custom_call.1} parent=11 // pred_fallthru
          _
      $region12: #{tpu_custom_call.1} parent=5 // pred_fallthru
        _
      %p257 = scmp.lt.s32.totalorder %s22, 4
      // Predicated region
      $region29: #{tpu_custom_call.1} parent=5 // pred_check
        %p258 = pneg %p257
      $region30: #{tpu_custom_call.1} parent=5 // pred_check_branch
        %260 = sbr.rel (%p258) target = $region32
      $region31: #{tpu_custom_call.1} parent=5 // pred_region
        // Predicated region
        $region33: #{tpu_custom_call.1} parent=31 // pred_check
          %p261 = pneg %p56
        $region34: #{tpu_custom_call.1} parent=31 // pred_check_branch
          %263 = sbr.rel (%p261) target = $region36
        $region35: #{tpu_custom_call.1} parent=31 // pred_region
          %s264 = sand.u32 %s46, 1
          %s265 = scalar_lea.sflag [#allocation3], %s264
          %s266 = sand.u32 %s46, 1
          %s267 = smul.addr %s266, 8
          %s268 = scalar_lea.vmem [#allocation2], %s267
          %s270 = ssub.s32 128, 128
          %271 = vsyncadd %s265, %s270
          %s272 = smul.addr %s29, 2
          %s273 = sadd.s32 %s30, %s272
          %s274 = smul.addr %s273, 128
          %s275 = scalar_lea.hbm %s0, %s274
          %s277 = sshll.u32 %s268, 4
          %s278 = int_to_ptr.vmem [resolvable:$true] %s277
          %280 = dma.hbm_to_vmem [thread:$0]  %s275, 128, %s278, %s265
        $region36: #{tpu_custom_call.1} parent=31 // pred_fallthru
          _
        // Predicated region
        $region37: #{tpu_custom_call.1} parent=31 // pred_check
          %p281 = pneg %p82
        $region38: #{tpu_custom_call.1} parent=31 // pred_check_branch
          %283 = sbr.rel (%p281) target = $region40
        $region39: #{tpu_custom_call.1} parent=31 // pred_region
          %s284 = sand.u32 %s22, 1
          %s285 = scalar_lea.sflag [#allocation6], %s284
          %s286 = sand.u32 %s72, 1
          %s287 = smul.addr %s286, 16
          %s288 = scalar_lea.vmem [#allocation5], %s287
          %s290 = ssub.s32 256, 256
          %291 = vsyncadd %s285, %s290
          %s292 = smul.addr %s29, 2
          %s293 = smul.addr %s292, 128
          %s294 = scalar_lea.hbm %s1, %s293
          %s295 = sshll.u32 %s288, 4
          %s296 = int_to_ptr.vmem [resolvable:$true] %s295
          %301 = dma.hbm_to_vmem [thread:$0]  %s294, 256, %s296, %s285, 128, 128, 8
        $region40: #{tpu_custom_call.1} parent=31 // pred_fallthru
          _
      $region32: #{tpu_custom_call.1} parent=5 // pred_fallthru
        _
      %p302 = scmp.le.s32.totalorder 1, %s22
      %p303 = scmp.lt.s32.totalorder %s22, 5
      %p304 = pnand %p302, %p303
      %p305 = pneg %p304
      // Predicated region
      $region41: #{tpu_custom_call.1} parent=5 // pred_check
        _
      $region42: #{tpu_custom_call.1} parent=5 // pred_check_branch
        %307 = sbr.rel (%p304) target = $region44
      $region43: #{tpu_custom_call.1} parent=5 // pred_region
        %s308 = ssub.s32 %s22, 1
        %s309 = sand.u32 %s49, 1
        %s310 = scalar_lea.sflag [#allocation3], %s309
        %s311 = sand.u32 %s49, 1
        %s312 = smul.addr %s311, 8
        %s313 = scalar_lea.vmem [#allocation2], %s312
        // Predicated region
        $region45: #{tpu_custom_call.1} parent=43 // pred_check
          %p314 = pneg %p62
        $region46: #{tpu_custom_call.1} parent=43 // pred_check_branch
          %316 = sbr.rel (%p314) target = $region48
        $region47: #{tpu_custom_call.1} parent=43 // pred_region
          %317 = dma.done %s310, 128
        $region48: #{tpu_custom_call.1} parent=43 // pred_fallthru
          _
        %s318 = sand.u32 %s27, 1
        %s319 = scalar_lea.sflag [#allocation6], %s318
        %s320 = sand.u32 %s75, 1
        %s321 = smul.addr %s320, 16
        %s322 = scalar_lea.vmem [#allocation5], %s321
        // Predicated region
        $region49: #{tpu_custom_call.1} parent=43 // pred_check
          %p323 = pneg %p88
        $region50: #{tpu_custom_call.1} parent=43 // pred_check_branch
          %325 = sbr.rel (%p323) target = $region52
        $region51: #{tpu_custom_call.1} parent=43 // pred_region
          %326 = dma.done %s319, 256
        $region52: #{tpu_custom_call.1} parent=43 // pred_fallthru
          _
        // Predicated region
        $region53: #{tpu_custom_call.1} parent=43 // pred_check
          %p327 = pneg %p109
        $region54: #{tpu_custom_call.1} parent=43 // pred_check_branch
          %329 = sbr.rel (%p327) target = $region56
        $region55: #{tpu_custom_call.1} parent=43 // pred_region
          %330 = dma.done [#allocation6], 512
        $region56: #{tpu_custom_call.1} parent=43 // pred_fallthru
          _
        // Predicated region
        $region57: #{tpu_custom_call.1} parent=43 // pred_check
          %p331 = pneg %p130
        $region58: #{tpu_custom_call.1} parent=43 // pred_check_branch
          %333 = sbr.rel (%p331) target = $region60
        $region59: #{tpu_custom_call.1} parent=43 // pred_region
          %334 = dma.done [#allocation9], 512
        $region60: #{tpu_custom_call.1} parent=43 // pred_fallthru
          _
        // Predicated region
        $region61: #{tpu_custom_call.1} parent=43 // pred_check
          %p335 = pneg %p151
        $region62: #{tpu_custom_call.1} parent=43 // pred_check_branch
          %337 = sbr.rel (%p335) target = $region64
        $region63: #{tpu_custom_call.1} parent=43 // pred_region
          %338 = dma.done [#allocation9], 512
        $region64: #{tpu_custom_call.1} parent=43 // pred_fallthru
          _
        %s339 = sand.u32 %s49, 1
        %s340 = scalar_lea.sflag [#allocation3], %s339
        %s341 = sand.u32 %s49, 1
        %s342 = smul.addr %s341, 8
        %s343 = scalar_lea.vmem [#allocation2], %s342
        %p344 = pneg %p62
        %p345 = pneg %p59
        %s346 = sand.u32 %s27, 1
        %s347 = scalar_lea.sflag [#allocation6], %s346
        %s348 = sand.u32 %s75, 1
        %s349 = smul.addr %s348, 16
        %s350 = scalar_lea.vmem [#allocation5], %s349
        %p351 = pneg %p88
        %p352 = pneg %p85
        %p353 = pneg %p109
        %p354 = pneg %p106
        %p355 = pneg %p130
        %p356 = pneg %p127
        %p357 = pneg %p151
        %p358 = pneg %p148
        %p359 = pneg %p172
        %p360 = pneg %p169
        %p361 = pneg %p200
        %p362 = pneg %p197
        %s363 = sand.u32 %s187, 1
        %s364 = scalar_lea.sflag [#allocation4], %s363
        %s365 = sand.u32 %s187, 1
        %s366 = smul.addr %s365, 8
        %s367 = scalar_lea.vmem [#allocation11], %s366
        %v368 = vld [vmem:[%s313] sm:$0xff]
        %v369 = vld [vmem:[#allocation7] sm:$0xff]
        %v370 = vld [vmem:[#allocation7 + $0x8] sm:$0xff]
        %v371 = vld [vmem:[#allocation7 + $0x10] sm:$0xff]
        %v372 = vld [vmem:[#allocation7 + $0x18] sm:$0xff]
        %vm373 = vcmask 261120
        %v375 = vsel %vm373, %v368, 0
        %377 = vmatprep.subr.mxu0 0.0
        %378 = vmatpush1.msra.mxu0 %v369
        %379 = vmatprep.subr.mxu0 0.0
        %380 = vmatpush1.msra.mxu0 %v370
        %381 = vmatprep.subr.mxu0 0.0
        %382 = vmatpush1.msra.mxu0 %v371
        %383 = vmatprep.subr.mxu0 0.0
        %384 = vmatpush1.msra.mxu0 %v372
        %385 = vmatprep.subr.mxu0 0.0
        %386 = vmatpush1.msra.mxu0 0.0
        %387 = vmatprep.subr.mxu0 0.0
        %388 = vmatpush1.msra.mxu0 0.0
        %389 = vmatprep.subr.mxu0 0.0
        %390 = vmatpush1.msra.mxu0 0.0
        %391 = vmatprep.subr.mxu0 0.0
        %392 = vmatpush1.msra.mxu0 0.0
        %393 = vmatprep.subr.mxu0 0.0
        %394 = vmatpush1.msra.mxu0 0.0
        %395 = vmatprep.subr.mxu0 0.0
        %396 = vmatpush1.msra.mxu0 0.0
        %397 = vmatprep.subr.mxu0 0.0
        %398 = vmatpush1.msra.mxu0 0.0
        %399 = vmatprep.subr.mxu0 0.0
        %400 = vmatpush1.msra.mxu0 0.0
        %401 = vmatprep.subr.mxu0 0.0
        %402 = vmatpush1.msra.mxu0 0.0
        %403 = vmatprep.subr.mxu0 0.0
        %404 = vmatpush1.msra.mxu0 0.0
        %405 = vmatprep.subr.mxu0 0.0
        %406 = vmatpush1.msra.mxu0 0.0
        %407 = vmatprep.subr.mxu0 0.0
        %408 = vmatpush1.msra.mxu0 0.0
        %409 = vmatprep.subr.mxu0 0.0
        %410 = vmatpush1.msra.mxu0 0.0
        %411 = vmatprep.subr.mxu0 0.0
        %412 = vmatpush1.msra.mxu0 0.0
        %413 = vmatprep.subr.mxu0 0.0
        %414 = vmatpush1.msra.mxu0 0.0
        %415 = vmatprep.subr.mxu0 0.0
        %416 = vmatpush1.msra.mxu0 0.0
        %417 = vmatprep.subr.mxu0 0.0
        %418 = vmatpush1.msra.mxu0 0.0
        %419 = vmatprep.subr.mxu0 0.0
        %420 = vmatpush1.msra.mxu0 0.0
        %421 = vmatprep.subr.mxu0 0.0
        %422 = vmatpush1.msra.mxu0 0.0
        %423 = vmatprep.subr.mxu0 0.0
        %424 = vmatpush1.msra.mxu0 0.0
        %425 = vmatprep.subr.mxu0 0.0
        %426 = vmatpush1.msra.mxu0 0.0
        %427 = vmatprep.subr.mxu0 0.0
        %428 = vmatpush1.msra.mxu0 0.0
        %429 = vmatprep.subr.mxu0 0.0
        %430 = vmatpush1.msra.mxu0 0.0
        %431 = vmatprep.subr.mxu0 0.0
        %432 = vmatpush1.msra.mxu0 0.0
        %433 = vmatprep.subr.mxu0 0.0
        %434 = vmatpush1.msra.mxu0 0.0
        %435 = vmatprep.subr.mxu0 0.0
        %436 = vmatpush1.msra.mxu0 0.0
        %437 = vmatprep.subr.mxu0 0.0
        %438 = vmatpush1.msra.mxu0 0.0
        %439 = vmatprep.subr.mxu0 0.0
        %440 = vmatpush1.msra.mxu0 0.0
        %441 = vmatprep.mubr.f32.mxu0 0.0
        %442 = vmatmul.mubr.f32.gmra.mrb[0].mxu0 %v375
        %v443 = vpop.f32.mrb[0].mxu0
        %v444 = vadd.f32 0.0, %v443
        %v445 = vpop.f32.mrb[0].mxu0
        %446 = vdwg.mxu0
        %s447 = smul.u32 %s32, 8
        %v448 = vlaneseq
        %v449 = vshrl.u32 %v448, 7
        %v450 = vstv %s447
        %v451 = vadd.s32 %v450, %v449
        %s452 = sadd.s32 %s32, 1
        // While loop
        $region65: #{tpu_custom_call.1} parent=43 // loop_pre_header
          _
        $region66: #{tpu_custom_call.1} parent=43 // loop_header
          %s454 = sphi 0, %s456
          %p455 = scmp.ge.s32.totalorder %s454, %s452
          %v459 = vphi -1e+30, %v637
          %v460 = vphi -1e+30, %v809
          %v461 = vphi -1e+30, %v981
          %v462 = vphi -1e+30, %v1153
          %v463 = vphi 0.0, %v648
          %v464 = vphi 0.0, %v820
          %v465 = vphi 0.0, %v992
          %v466 = vphi 0.0, %v1164
          %v467 = vphi 0.0, %v726
          %v468 = vphi 0.0, %v898
          %v469 = vphi 0.0, %v1070
          %v470 = vphi 0.0, %v1242
        $region67: #{tpu_custom_call.1} parent=43 // loop_header_branch
          %458 = sbr.rel (%p455) target = $region71
        $region68: #{tpu_custom_call.1} parent=43 // loop_body
          %s471 = smul.u32 %s454, 8
          %s472 = scalar_lea.vmem %s322, %s471 [#allocation5]
          %v473 = vld [vmem:[%s472] sm:$0xff]
          %v474 = vld [vmem:[#allocation8] sm:$0xff]
          %v475 = vld [vmem:[#allocation8 + $0x8] sm:$0xff]
          %v476 = vld [vmem:[#allocation8 + $0x10] sm:$0xff]
          %v477 = vld [vmem:[#allocation8 + $0x18] sm:$0xff]
          %v479 = vsel %vm373, %v473, 0
          %481 = vmatprep.subr.mxu0 0.0
          %482 = vmatpush1.msra.mxu0 %v474
          %483 = vmatprep.subr.mxu0 0.0
          %484 = vmatpush1.msra.mxu0 %v475
          %485 = vmatprep.subr.mxu0 0.0
          %486 = vmatpush1.msra.mxu0 %v476
          %487 = vmatprep.subr.mxu0 0.0
          %488 = vmatpush1.msra.mxu0 %v477
          %489 = vmatprep.subr.mxu0 0.0
          %490 = vmatpush1.msra.mxu0 0.0
          %491 = vmatprep.subr.mxu0 0.0
          %492 = vmatpush1.msra.mxu0 0.0
          %493 = vmatprep.subr.mxu0 0.0
          %494 = vmatpush1.msra.mxu0 0.0
          %495 = vmatprep.subr.mxu0 0.0
          %496 = vmatpush1.msra.mxu0 0.0
          %497 = vmatprep.subr.mxu0 0.0
          %498 = vmatpush1.msra.mxu0 0.0
          %499 = vmatprep.subr.mxu0 0.0
          %500 = vmatpush1.msra.mxu0 0.0
          %501 = vmatprep.subr.mxu0 0.0
          %502 = vmatpush1.msra.mxu0 0.0
          %503 = vmatprep.subr.mxu0 0.0
          %504 = vmatpush1.msra.mxu0 0.0
          %505 = vmatprep.subr.mxu0 0.0
          %506 = vmatpush1.msra.mxu0 0.0
          %507 = vmatprep.subr.mxu0 0.0
          %508 = vmatpush1.msra.mxu0 0.0
          %509 = vmatprep.subr.mxu0 0.0
          %510 = vmatpush1.msra.mxu0 0.0
          %511 = vmatprep.subr.mxu0 0.0
          %512 = vmatpush1.msra.mxu0 0.0
          %513 = vmatprep.subr.mxu0 0.0
          %514 = vmatpush1.msra.mxu0 0.0
          %515 = vmatprep.subr.mxu0 0.0
          %516 = vmatpush1.msra.mxu0 0.0
          %517 = vmatprep.subr.mxu0 0.0
          %518 = vmatpush1.msra.mxu0 0.0
          %519 = vmatprep.subr.mxu0 0.0
          %520 = vmatpush1.msra.mxu0 0.0
          %521 = vmatprep.subr.mxu0 0.0
          %522 = vmatpush1.msra.mxu0 0.0
          %523 = vmatprep.subr.mxu0 0.0
          %524 = vmatpush1.msra.mxu0 0.0
          %525 = vmatprep.subr.mxu0 0.0
          %526 = vmatpush1.msra.mxu0 0.0
          %527 = vmatprep.subr.mxu0 0.0
          %528 = vmatpush1.msra.mxu0 0.0
          %529 = vmatprep.subr.mxu0 0.0
          %530 = vmatpush1.msra.mxu0 0.0
          %531 = vmatprep.subr.mxu0 0.0
          %532 = vmatpush1.msra.mxu0 0.0
          %533 = vmatprep.subr.mxu0 0.0
          %534 = vmatpush1.msra.mxu0 0.0
          %535 = vmatprep.subr.mxu0 0.0
          %536 = vmatpush1.msra.mxu0 0.0
          %537 = vmatprep.subr.mxu0 0.0
          %538 = vmatpush1.msra.mxu0 0.0
          %539 = vmatprep.subr.mxu0 0.0
          %540 = vmatpush1.msra.mxu0 0.0
          %541 = vmatprep.subr.mxu0 0.0
          %542 = vmatpush1.msra.mxu0 0.0
          %543 = vmatprep.subr.mxu0 0.0
          %544 = vmatpush1.msra.mxu0 0.0
          %545 = vmatprep.mubr.f32.mxu0 0.0
          %546 = vmatmul.mubr.f32.gmra.mrb[0].mxu0 %v479
          %v547 = vpop.f32.mrb[0].mxu0
          %v548 = vadd.f32 0.0, %v547
          %v549 = vpop.f32.mrb[0].mxu0
          %550 = vdwg.mxu0
          %v551 = vlaneseq
          %v552 = vand.u32 %v551, 127
          %v553 = vstv %s471
          %v554 = vadd.s32 %v553, %v552
          %vm555 = vcmp.le.s32.totalorder %v554, %v451
          %vm556 = vcmask 64512
          %v558 = vsel %vm556, %v444, 0
          %v561 = vsel %vm556, %v548, 0
          %563 = vmatprep.subr.mxu0 0.0
          %564 = vmatpush1.xpose.msra.mxu0 %v561
          %565 = vmatprep.subr.mxu0 0.0
          %566 = vmatpush1.xpose.msra.mxu0 0.0
          %567 = vmatprep.subr.mxu0 0.0
          %568 = vmatpush1.xpose.msra.mxu0 0.0
          %569 = vmatprep.subr.mxu0 0.0
          %570 = vmatpush1.xpose.msra.mxu0 0.0
          %571 = vmatprep.subr.mxu0 0.0
          %572 = vmatpush1.xpose.msra.mxu0 0.0
          %573 = vmatprep.subr.mxu0 0.0
          %574 = vmatpush1.xpose.msra.mxu0 0.0
          %575 = vmatprep.subr.mxu0 0.0
          %576 = vmatpush1.xpose.msra.mxu0 0.0
          %577 = vmatprep.subr.mxu0 0.0
          %578 = vmatpush1.xpose.msra.mxu0 0.0
          %579 = vmatprep.subr.mxu0 0.0
          %580 = vmatpush1.xpose.msra.mxu0 0.0
          %581 = vmatprep.subr.mxu0 0.0
          %582 = vmatpush1.xpose.msra.mxu0 0.0
          %583 = vmatprep.subr.mxu0 0.0
          %584 = vmatpush1.xpose.msra.mxu0 0.0
          %585 = vmatprep.subr.mxu0 0.0
          %586 = vmatpush1.xpose.msra.mxu0 0.0
          %587 = vmatprep.subr.mxu0 0.0
          %588 = vmatpush1.xpose.msra.mxu0 0.0
          %589 = vmatprep.subr.mxu0 0.0
          %590 = vmatpush1.xpose.msra.mxu0 0.0
          %591 = vmatprep.subr.mxu0 0.0
          %592 = vmatpush1.xpose.msra.mxu0 0.0
          %593 = vmatprep.subr.mxu0 0.0
          %594 = vmatpush1.xpose.msra.mxu0 0.0
          %595 = vmatprep.subr.mxu0 0.0
          %596 = vmatpush1.xpose.msra.mxu0 0.0
          %597 = vmatprep.subr.mxu0 0.0
          %598 = vmatpush1.xpose.msra.mxu0 0.0
          %599 = vmatprep.subr.mxu0 0.0
          %600 = vmatpush1.xpose.msra.mxu0 0.0
          %601 = vmatprep.subr.mxu0 0.0
          %602 = vmatpush1.xpose.msra.mxu0 0.0
          %603 = vmatprep.subr.mxu0 0.0
          %604 = vmatpush1.xpose.msra.mxu0 0.0
          %605 = vmatprep.subr.mxu0 0.0
          %606 = vmatpush1.xpose.msra.mxu0 0.0
          %607 = vmatprep.subr.mxu0 0.0
          %608 = vmatpush1.xpose.msra.mxu0 0.0
          %609 = vmatprep.subr.mxu0 0.0
          %610 = vmatpush1.xpose.msra.mxu0 0.0
          %611 = vmatprep.subr.mxu0 0.0
          %612 = vmatpush1.xpose.msra.mxu0 0.0
          %613 = vmatprep.subr.mxu0 0.0
          %614 = vmatpush1.xpose.msra.mxu0 0.0
          %615 = vmatprep.subr.mxu0 0.0
          %616 = vmatpush1.xpose.msra.mxu0 0.0
          %617 = vmatprep.subr.mxu0 0.0
          %618 = vmatpush1.xpose.msra.mxu0 0.0
          %619 = vmatprep.subr.mxu0 0.0
          %620 = vmatpush1.xpose.msra.mxu0 0.0
          %621 = vmatprep.subr.mxu0 0.0
          %622 = vmatpush1.xpose.msra.mxu0 0.0
          %623 = vmatprep.subr.mxu0 0.0
          %624 = vmatpush1.xpose.msra.mxu0 0.0
          %625 = vmatprep.subr.mxu0 0.0
          %626 = vmatpush1.xpose.msra.mxu0 0.0
          %627 = vmatprep.mubr.f32.mxu0 0.0
          %628 = vmatmul.mubr.f32.gmra.mrb[0].mxu0 %v558
          %v629 = vpop.f32.mrb[0].mxu0
          %v630 = vadd.f32 0.0, %v629
          %v631 = vpop.f32.mrb[0].mxu0
          %632 = vdwg.mxu0
          %v633 = vsel %vm555, %v630, -1e+30
          %v634 = vsel %vm556, %v633, -inf
          %635 = vmax.xlane.f32.xlu0 %v634
          %v636 = vpop.xlane.xlu0 %635
          %v637 = vmax.f32 %v459, %v636
          %v638 = vsub.f32 %v459, %v637
          %v639 = vmul.f32 %v638, 1.442695
          %v640 = vpow.pop %v639
          %v641 = vsub.f32 %v633, %v637
          %v642 = vmul.f32 %v641, 1.442695
          %v643 = vpow.pop %v642
          %v644 = vmul.f32 %v640, %v463
          %v645 = vsel %vm556, %v643, 0.0
          %646 = vadd.xlane.f32.xlu0 %v645
          %v647 = vpop.xlane.xlu0 %646
          %v648 = vadd.f32 %v644, %v647
          %v649 = vmul.f32 %v640, %v467
          %650 = vrot.lane.b32.xlu0 %v548, 96
          %v651 = vpop.permute.xlu0 %650
          %v654 = vsel %vm556, %v643, 0
          %656 = vmatprep.subr.mxu0 0.0
          %657 = vmatpush1.msra.mxu0 %v651
          %658 = vmatprep.subr.mxu0 0.0
          %659 = vmatpush1.msra.mxu0 0.0
          %660 = vmatprep.subr.mxu0 0.0
          %661 = vmatpush1.msra.mxu0 0.0
          %662 = vmatprep.subr.mxu0 0.0
          %663 = vmatpush1.msra.mxu0 0.0
          %664 = vmatprep.subr.mxu0 0.0
          %665 = vmatpush1.msra.mxu0 0.0
          %666 = vmatprep.subr.mxu0 0.0
          %667 = vmatpush1.msra.mxu0 0.0
          %668 = vmatprep.subr.mxu0 0.0
          %669 = vmatpush1.msra.mxu0 0.0
          %670 = vmatprep.subr.mxu0 0.0
          %671 = vmatpush1.msra.mxu0 0.0
          %672 = vmatprep.subr.mxu0 0.0
          %673 = vmatpush1.msra.mxu0 0.0
          %674 = vmatprep.subr.mxu0 0.0
          %675 = vmatpush1.msra.mxu0 0.0
          %676 = vmatprep.subr.mxu0 0.0
          %677 = vmatpush1.msra.mxu0 0.0
          %678 = vmatprep.subr.mxu0 0.0
          %679 = vmatpush1.msra.mxu0 0.0
          %680 = vmatprep.subr.mxu0 0.0
          %681 = vmatpush1.msra.mxu0 0.0
          %682 = vmatprep.subr.mxu0 0.0
          %683 = vmatpush1.msra.mxu0 0.0
          %684 = vmatprep.subr.mxu0 0.0
          %685 = vmatpush1.msra.mxu0 0.0
          %686 = vmatprep.subr.mxu0 0.0
          %687 = vmatpush1.msra.mxu0 0.0
          %688 = vmatprep.subr.mxu0 0.0
          %689 = vmatpush1.msra.mxu0 0.0
          %690 = vmatprep.subr.mxu0 0.0
          %691 = vmatpush1.msra.mxu0 0.0
          %692 = vmatprep.subr.mxu0 0.0
          %693 = vmatpush1.msra.mxu0 0.0
          %694 = vmatprep.subr.mxu0 0.0
          %695 = vmatpush1.msra.mxu0 0.0
          %696 = vmatprep.subr.mxu0 0.0
          %697 = vmatpush1.msra.mxu0 0.0
          %698 = vmatprep.subr.mxu0 0.0
          %699 = vmatpush1.msra.mxu0 0.0
          %700 = vmatprep.subr.mxu0 0.0
          %701 = vmatpush1.msra.mxu0 0.0
          %702 = vmatprep.subr.mxu0 0.0
          %703 = vmatpush1.msra.mxu0 0.0
          %704 = vmatprep.subr.mxu0 0.0
          %705 = vmatpush1.msra.mxu0 0.0
          %706 = vmatprep.subr.mxu0 0.0
          %707 = vmatpush1.msra.mxu0 0.0
          %708 = vmatprep.subr.mxu0 0.0
          %709 = vmatpush1.msra.mxu0 0.0
          %710 = vmatprep.subr.mxu0 0.0
          %711 = vmatpush1.msra.mxu0 0.0
          %712 = vmatprep.subr.mxu0 0.0
          %713 = vmatpush1.msra.mxu0 0.0
          %714 = vmatprep.subr.mxu0 0.0
          %715 = vmatpush1.msra.mxu0 0.0
          %716 = vmatprep.subr.mxu0 0.0
          %717 = vmatpush1.msra.mxu0 0.0
          %718 = vmatprep.subr.mxu0 0.0
          %719 = vmatpush1.msra.mxu0 0.0
          %720 = vmatprep.mubr.f32.mxu0 0.0
          %721 = vmatmul.mubr.f32.gmra.mrb[0].mxu0 %v654
          %v722 = vpop.f32.mrb[0].mxu0
          %v723 = vadd.f32 0.0, %v722
          %v724 = vpop.f32.mrb[0].mxu0
          %725 = vdwg.mxu0
          %v726 = vadd.f32 %v649, %v723
          %727 = vrot.lane.b32.xlu0 %v444, 120
          %v728 = vpop.permute.xlu0 %727
          %729 = vrot.lane.b32.xlu0 %v548, 120
          %v730 = vpop.permute.xlu0 %729
          %v731 = vsel %vm556, %v728, 0
          %v733 = vsel %vm556, %v730, 0
          %735 = vmatprep.subr.mxu0 0.0
          %736 = vmatpush1.xpose.msra.mxu0 %v733
          %737 = vmatprep.subr.mxu0 0.0
          %738 = vmatpush1.xpose.msra.mxu0 0.0
          %739 = vmatprep.subr.mxu0 0.0
          %740 = vmatpush1.xpose.msra.mxu0 0.0
          %741 = vmatprep.subr.mxu0 0.0
          %742 = vmatpush1.xpose.msra.mxu0 0.0
          %743 = vmatprep.subr.mxu0 0.0
          %744 = vmatpush1.xpose.msra.mxu0 0.0
          %745 = vmatprep.subr.mxu0 0.0
          %746 = vmatpush1.xpose.msra.mxu0 0.0
          %747 = vmatprep.subr.mxu0 0.0
          %748 = vmatpush1.xpose.msra.mxu0 0.0
          %749 = vmatprep.subr.mxu0 0.0
          %750 = vmatpush1.xpose.msra.mxu0 0.0
          %751 = vmatprep.subr.mxu0 0.0
          %752 = vmatpush1.xpose.msra.mxu0 0.0
          %753 = vmatprep.subr.mxu0 0.0
          %754 = vmatpush1.xpose.msra.mxu0 0.0
          %755 = vmatprep.subr.mxu0 0.0
          %756 = vmatpush1.xpose.msra.mxu0 0.0
          %757 = vmatprep.subr.mxu0 0.0
          %758 = vmatpush1.xpose.msra.mxu0 0.0
          %759 = vmatprep.subr.mxu0 0.0
          %760 = vmatpush1.xpose.msra.mxu0 0.0
          %761 = vmatprep.subr.mxu0 0.0
          %762 = vmatpush1.xpose.msra.mxu0 0.0
          %763 = vmatprep.subr.mxu0 0.0
          %764 = vmatpush1.xpose.msra.mxu0 0.0
          %765 = vmatprep.subr.mxu0 0.0
          %766 = vmatpush1.xpose.msra.mxu0 0.0
          %767 = vmatprep.subr.mxu0 0.0
          %768 = vmatpush1.xpose.msra.mxu0 0.0
          %769 = vmatprep.subr.mxu0 0.0
          %770 = vmatpush1.xpose.msra.mxu0 0.0
          %771 = vmatprep.subr.mxu0 0.0
          %772 = vmatpush1.xpose.msra.mxu0 0.0
          %773 = vmatprep.subr.mxu0 0.0
          %774 = vmatpush1.xpose.msra.mxu0 0.0
          %775 = vmatprep.subr.mxu0 0.0
          %776 = vmatpush1.xpose.msra.mxu0 0.0
          %777 = vmatprep.subr.mxu0 0.0
          %778 = vmatpush1.xpose.msra.mxu0 0.0
          %779 = vmatprep.subr.mxu0 0.0
          %780 = vmatpush1.xpose.msra.mxu0 0.0
          %781 = vmatprep.subr.mxu0 0.0
          %782 = vmatpush1.xpose.msra.mxu0 0.0
          %783 = vmatprep.subr.mxu0 0.0
          %784 = vmatpush1.xpose.msra.mxu0 0.0
          %785 = vmatprep.subr.mxu0 0.0
          %786 = vmatpush1.xpose.msra.mxu0 0.0
          %787 = vmatprep.subr.mxu0 0.0
          %788 = vmatpush1.xpose.msra.mxu0 0.0
          %789 = vmatprep.subr.mxu0 0.0
          %790 = vmatpush1.xpose.msra.mxu0 0.0
          %791 = vmatprep.subr.mxu0 0.0
          %792 = vmatpush1.xpose.msra.mxu0 0.0
          %793 = vmatprep.subr.mxu0 0.0
          %794 = vmatpush1.xpose.msra.mxu0 0.0
          %795 = vmatprep.subr.mxu0 0.0
          %796 = vmatpush1.xpose.msra.mxu0 0.0
          %797 = vmatprep.subr.mxu0 0.0
          %798 = vmatpush1.xpose.msra.mxu0 0.0
          %799 = vmatprep.mubr.f32.mxu0 0.0
          %800 = vmatmul.mubr.f32.gmra.mrb[0].mxu0 %v731
          %v801 = vpop.f32.mrb[0].mxu0
          %v802 = vadd.f32 0.0, %v801
          %v803 = vpop.f32.mrb[0].mxu0
          %804 = vdwg.mxu0
          %v805 = vsel %vm555, %v802, -1e+30
          %v806 = vsel %vm556, %v805, -inf
          %807 = vmax.xlane.f32.xlu0 %v806
          %v808 = vpop.xlane.xlu0 %807
          %v809 = vmax.f32 %v460, %v808
          %v810 = vsub.f32 %v460, %v809
          %v811 = vmul.f32 %v810, 1.442695
          %v812 = vpow.pop %v811
          %v813 = vsub.f32 %v805, %v809
          %v814 = vmul.f32 %v813, 1.442695
          %v815 = vpow.pop %v814
          %v816 = vmul.f32 %v812, %v464
          %v817 = vsel %vm556, %v815, 0.0
          %818 = vadd.xlane.f32.xlu0 %v817
          %v819 = vpop.xlane.xlu0 %818
          %v820 = vadd.f32 %v816, %v819
          %v821 = vmul.f32 %v812, %v468
          %822 = vrot.lane.b32.xlu0 %v548, 88
          %v823 = vpop.permute.xlu0 %822
          %v826 = vsel %vm556, %v815, 0
          %828 = vmatprep.subr.mxu0 0.0
          %829 = vmatpush1.msra.mxu0 %v823
          %830 = vmatprep.subr.mxu0 0.0
          %831 = vmatpush1.msra.mxu0 0.0
          %832 = vmatprep.subr.mxu0 0.0
          %833 = vmatpush1.msra.mxu0 0.0
          %834 = vmatprep.subr.mxu0 0.0
          %835 = vmatpush1.msra.mxu0 0.0
          %836 = vmatprep.subr.mxu0 0.0
          %837 = vmatpush1.msra.mxu0 0.0
          %838 = vmatprep.subr.mxu0 0.0
          %839 = vmatpush1.msra.mxu0 0.0
          %840 = vmatprep.subr.mxu0 0.0
          %841 = vmatpush1.msra.mxu0 0.0
          %842 = vmatprep.subr.mxu0 0.0
          %843 = vmatpush1.msra.mxu0 0.0
          %844 = vmatprep.subr.mxu0 0.0
          %845 = vmatpush1.msra.mxu0 0.0
          %846 = vmatprep.subr.mxu0 0.0
          %847 = vmatpush1.msra.mxu0 0.0
          %848 = vmatprep.subr.mxu0 0.0
          %849 = vmatpush1.msra.mxu0 0.0
          %850 = vmatprep.subr.mxu0 0.0
          %851 = vmatpush1.msra.mxu0 0.0
          %852 = vmatprep.subr.mxu0 0.0
          %853 = vmatpush1.msra.mxu0 0.0
          %854 = vmatprep.subr.mxu0 0.0
          %855 = vmatpush1.msra.mxu0 0.0
          %856 = vmatprep.subr.mxu0 0.0
          %857 = vmatpush1.msra.mxu0 0.0
          %858 = vmatprep.subr.mxu0 0.0
          %859 = vmatpush1.msra.mxu0 0.0
          %860 = vmatprep.subr.mxu0 0.0
          %861 = vmatpush1.msra.mxu0 0.0
          %862 = vmatprep.subr.mxu0 0.0
          %863 = vmatpush1.msra.mxu0 0.0
          %864 = vmatprep.subr.mxu0 0.0
          %865 = vmatpush1.msra.mxu0 0.0
          %866 = vmatprep.subr.mxu0 0.0
          %867 = vmatpush1.msra.mxu0 0.0
          %868 = vmatprep.subr.mxu0 0.0
          %869 = vmatpush1.msra.mxu0 0.0
          %870 = vmatprep.subr.mxu0 0.0
          %871 = vmatpush1.msra.mxu0 0.0
          %872 = vmatprep.subr.mxu0 0.0
          %873 = vmatpush1.msra.mxu0 0.0
          %874 = vmatprep.subr.mxu0 0.0
          %875 = vmatpush1.msra.mxu0 0.0
          %876 = vmatprep.subr.mxu0 0.0
          %877 = vmatpush1.msra.mxu0 0.0
          %878 = vmatprep.subr.mxu0 0.0
          %879 = vmatpush1.msra.mxu0 0.0
          %880 = vmatprep.subr.mxu0 0.0
          %881 = vmatpush1.msra.mxu0 0.0
          %882 = vmatprep.subr.mxu0 0.0
          %883 = vmatpush1.msra.mxu0 0.0
          %884 = vmatprep.subr.mxu0 0.0
          %885 = vmatpush1.msra.mxu0 0.0
          %886 = vmatprep.subr.mxu0 0.0
          %887 = vmatpush1.msra.mxu0 0.0
          %888 = vmatprep.subr.mxu0 0.0
          %889 = vmatpush1.msra.mxu0 0.0
          %890 = vmatprep.subr.mxu0 0.0
          %891 = vmatpush1.msra.mxu0 0.0
          %892 = vmatprep.mubr.f32.mxu0 0.0
          %893 = vmatmul.mubr.f32.gmra.mrb[0].mxu0 %v826
          %v894 = vpop.f32.mrb[0].mxu0
          %v895 = vadd.f32 0.0, %v894
          %v896 = vpop.f32.mrb[0].mxu0
          %897 = vdwg.mxu0
          %v898 = vadd.f32 %v821, %v895
          %899 = vrot.lane.b32.xlu0 %v444, 112
          %v900 = vpop.permute.xlu0 %899
          %901 = vrot.lane.b32.xlu0 %v548, 112
          %v902 = vpop.permute.xlu0 %901
          %v903 = vsel %vm556, %v900, 0
          %v905 = vsel %vm556, %v902, 0
          %907 = vmatprep.subr.mxu0 0.0
          %908 = vmatpush1.xpose.msra.mxu0 %v905
          %909 = vmatprep.subr.mxu0 0.0
          %910 = vmatpush1.xpose.msra.mxu0 0.0
          %911 = vmatprep.subr.mxu0 0.0
          %912 = vmatpush1.xpose.msra.mxu0 0.0
          %913 = vmatprep.subr.mxu0 0.0
          %914 = vmatpush1.xpose.msra.mxu0 0.0
          %915 = vmatprep.subr.mxu0 0.0
          %916 = vmatpush1.xpose.msra.mxu0 0.0
          %917 = vmatprep.subr.mxu0 0.0
          %918 = vmatpush1.xpose.msra.mxu0 0.0
          %919 = vmatprep.subr.mxu0 0.0
          %920 = vmatpush1.xpose.msra.mxu0 0.0
          %921 = vmatprep.subr.mxu0 0.0
          %922 = vmatpush1.xpose.msra.mxu0 0.0
          %923 = vmatprep.subr.mxu0 0.0
          %924 = vmatpush1.xpose.msra.mxu0 0.0
          %925 = vmatprep.subr.mxu0 0.0
          %926 = vmatpush1.xpose.msra.mxu0 0.0
          %927 = vmatprep.subr.mxu0 0.0
          %928 = vmatpush1.xpose.msra.mxu0 0.0
          %929 = vmatprep.subr.mxu0 0.0
          %930 = vmatpush1.xpose.msra.mxu0 0.0
          %931 = vmatprep.subr.mxu0 0.0
          %932 = vmatpush1.xpose.msra.mxu0 0.0
          %933 = vmatprep.subr.mxu0 0.0
          %934 = vmatpush1.xpose.msra.mxu0 0.0
          %935 = vmatprep.subr.mxu0 0.0
          %936 = vmatpush1.xpose.msra.mxu0 0.0
          %937 = vmatprep.subr.mxu0 0.0
          %938 = vmatpush1.xpose.msra.mxu0 0.0
          %939 = vmatprep.subr.mxu0 0.0
          %940 = vmatpush1.xpose.msra.mxu0 0.0
          %941 = vmatprep.subr.mxu0 0.0
          %942 = vmatpush1.xpose.msra.mxu0 0.0
          %943 = vmatprep.subr.mxu0 0.0
          %944 = vmatpush1.xpose.msra.mxu0 0.0
          %945 = vmatprep.subr.mxu0 0.0
          %946 = vmatpush1.xpose.msra.mxu0 0.0
          %947 = vmatprep.subr.mxu0 0.0
          %948 = vmatpush1.xpose.msra.mxu0 0.0
          %949 = vmatprep.subr.mxu0 0.0
          %950 = vmatpush1.xpose.msra.mxu0 0.0
          %951 = vmatprep.subr.mxu0 0.0
          %952 = vmatpush1.xpose.msra.mxu0 0.0
          %953 = vmatprep.subr.mxu0 0.0
          %954 = vmatpush1.xpose.msra.mxu0 0.0
          %955 = vmatprep.subr.mxu0 0.0
          %956 = vmatpush1.xpose.msra.mxu0 0.0
          %957 = vmatprep.subr.mxu0 0.0
          %958 = vmatpush1.xpose.msra.mxu0 0.0
          %959 = vmatprep.subr.mxu0 0.0
          %960 = vmatpush1.xpose.msra.mxu0 0.0
          %961 = vmatprep.subr.mxu0 0.0
          %962 = vmatpush1.xpose.msra.mxu0 0.0
          %963 = vmatprep.subr.mxu0 0.0
          %964 = vmatpush1.xpose.msra.mxu0 0.0
          %965 = vmatprep.subr.mxu0 0.0
          %966 = vmatpush1.xpose.msra.mxu0 0.0
          %967 = vmatprep.subr.mxu0 0.0
          %968 = vmatpush1.xpose.msra.mxu0 0.0
          %969 = vmatprep.subr.mxu0 0.0
          %970 = vmatpush1.xpose.msra.mxu0 0.0
          %971 = vmatprep.mubr.f32.mxu0 0.0
          %972 = vmatmul.mubr.f32.gmra.mrb[0].mxu0 %v903
          %v973 = vpop.f32.mrb[0].mxu0
          %v974 = vadd.f32 0.0, %v973
          %v975 = vpop.f32.mrb[0].mxu0
          %976 = vdwg.mxu0
          %v977 = vsel %vm555, %v974, -1e+30
          %v978 = vsel %vm556, %v977, -inf
          %979 = vmax.xlane.f32.xlu0 %v978
          %v980 = vpop.xlane.xlu0 %979
          %v981 = vmax.f32 %v461, %v980
          %v982 = vsub.f32 %v461, %v981
          %v983 = vmul.f32 %v982, 1.442695
          %v984 = vpow.pop %v983
          %v985 = vsub.f32 %v977, %v981
          %v986 = vmul.f32 %v985, 1.442695
          %v987 = vpow.pop %v986
          %v988 = vmul.f32 %v984, %v465
          %v989 = vsel %vm556, %v987, 0.0
          %990 = vadd.xlane.f32.xlu0 %v989
          %v991 = vpop.xlane.xlu0 %990
          %v992 = vadd.f32 %v988, %v991
          %v993 = vmul.f32 %v984, %v469
          %994 = vrot.lane.b32.xlu0 %v548, 80
          %v995 = vpop.permute.xlu0 %994
          %v998 = vsel %vm556, %v987, 0
          %1000 = vmatprep.subr.mxu0 0.0
          %1001 = vmatpush1.msra.mxu0 %v995
          %1002 = vmatprep.subr.mxu0 0.0
          %1003 = vmatpush1.msra.mxu0 0.0
          %1004 = vmatprep.subr.mxu0 0.0
          %1005 = vmatpush1.msra.mxu0 0.0
          %1006 = vmatprep.subr.mxu0 0.0
          %1007 = vmatpush1.msra.mxu0 0.0
          %1008 = vmatprep.subr.mxu0 0.0
          %1009 = vmatpush1.msra.mxu0 0.0
          %1010 = vmatprep.subr.mxu0 0.0
          %1011 = vmatpush1.msra.mxu0 0.0
          %1012 = vmatprep.subr.mxu0 0.0
          %1013 = vmatpush1.msra.mxu0 0.0
          %1014 = vmatprep.subr.mxu0 0.0
          %1015 = vmatpush1.msra.mxu0 0.0
          %1016 = vmatprep.subr.mxu0 0.0
          %1017 = vmatpush1.msra.mxu0 0.0
          %1018 = vmatprep.subr.mxu0 0.0
          %1019 = vmatpush1.msra.mxu0 0.0
          %1020 = vmatprep.subr.mxu0 0.0
          %1021 = vmatpush1.msra.mxu0 0.0
          %1022 = vmatprep.subr.mxu0 0.0
          %1023 = vmatpush1.msra.mxu0 0.0
          %1024 = vmatprep.subr.mxu0 0.0
          %1025 = vmatpush1.msra.mxu0 0.0
          %1026 = vmatprep.subr.mxu0 0.0
          %1027 = vmatpush1.msra.mxu0 0.0
          %1028 = vmatprep.subr.mxu0 0.0
          %1029 = vmatpush1.msra.mxu0 0.0
          %1030 = vmatprep.subr.mxu0 0.0
          %1031 = vmatpush1.msra.mxu0 0.0
          %1032 = vmatprep.subr.mxu0 0.0
          %1033 = vmatpush1.msra.mxu0 0.0
          %1034 = vmatprep.subr.mxu0 0.0
          %1035 = vmatpush1.msra.mxu0 0.0
          %1036 = vmatprep.subr.mxu0 0.0
          %1037 = vmatpush1.msra.mxu0 0.0
          %1038 = vmatprep.subr.mxu0 0.0
          %1039 = vmatpush1.msra.mxu0 0.0
          %1040 = vmatprep.subr.mxu0 0.0
          %1041 = vmatpush1.msra.mxu0 0.0
          %1042 = vmatprep.subr.mxu0 0.0
          %1043 = vmatpush1.msra.mxu0 0.0
          %1044 = vmatprep.subr.mxu0 0.0
          %1045 = vmatpush1.msra.mxu0 0.0
          %1046 = vmatprep.subr.mxu0 0.0
          %1047 = vmatpush1.msra.mxu0 0.0
          %1048 = vmatprep.subr.mxu0 0.0
          %1049 = vmatpush1.msra.mxu0 0.0
          %1050 = vmatprep.subr.mxu0 0.0
          %1051 = vmatpush1.msra.mxu0 0.0
          %1052 = vmatprep.subr.mxu0 0.0
          %1053 = vmatpush1.msra.mxu0 0.0
          %1054 = vmatprep.subr.mxu0 0.0
          %1055 = vmatpush1.msra.mxu0 0.0
          %1056 = vmatprep.subr.mxu0 0.0
          %1057 = vmatpush1.msra.mxu0 0.0
          %1058 = vmatprep.subr.mxu0 0.0
          %1059 = vmatpush1.msra.mxu0 0.0
          %1060 = vmatprep.subr.mxu0 0.0
          %1061 = vmatpush1.msra.mxu0 0.0
          %1062 = vmatprep.subr.mxu0 0.0
          %1063 = vmatpush1.msra.mxu0 0.0
          %1064 = vmatprep.mubr.f32.mxu0 0.0
          %1065 = vmatmul.mubr.f32.gmra.mrb[0].mxu0 %v998
          %v1066 = vpop.f32.mrb[0].mxu0
          %v1067 = vadd.f32 0.0, %v1066
          %v1068 = vpop.f32.mrb[0].mxu0
          %1069 = vdwg.mxu0
          %v1070 = vadd.f32 %v993, %v1067
          %1071 = vrot.lane.b32.xlu0 %v444, 104
          %v1072 = vpop.permute.xlu0 %1071
          %1073 = vrot.lane.b32.xlu0 %v548, 104
          %v1074 = vpop.permute.xlu0 %1073
          %v1075 = vsel %vm556, %v1072, 0
          %v1077 = vsel %vm556, %v1074, 0
          %1079 = vmatprep.subr.mxu0 0.0
          %1080 = vmatpush1.xpose.msra.mxu0 %v1077
          %1081 = vmatprep.subr.mxu0 0.0
          %1082 = vmatpush1.xpose.msra.mxu0 0.0
          %1083 = vmatprep.subr.mxu0 0.0
          %1084 = vmatpush1.xpose.msra.mxu0 0.0
          %1085 = vmatprep.subr.mxu0 0.0
          %1086 = vmatpush1.xpose.msra.mxu0 0.0
          %1087 = vmatprep.subr.mxu0 0.0
          %1088 = vmatpush1.xpose.msra.mxu0 0.0
          %1089 = vmatprep.subr.mxu0 0.0
          %1090 = vmatpush1.xpose.msra.mxu0 0.0
          %1091 = vmatprep.subr.mxu0 0.0
          %1092 = vmatpush1.xpose.msra.mxu0 0.0
          %1093 = vmatprep.subr.mxu0 0.0
          %1094 = vmatpush1.xpose.msra.mxu0 0.0
          %1095 = vmatprep.subr.mxu0 0.0
          %1096 = vmatpush1.xpose.msra.mxu0 0.0
          %1097 = vmatprep.subr.mxu0 0.0
          %1098 = vmatpush1.xpose.msra.mxu0 0.0
          %1099 = vmatprep.subr.mxu0 0.0
          %1100 = vmatpush1.xpose.msra.mxu0 0.0
          %1101 = vmatprep.subr.mxu0 0.0
          %1102 = vmatpush1.xpose.msra.mxu0 0.0
          %1103 = vmatprep.subr.mxu0 0.0
          %1104 = vmatpush1.xpose.msra.mxu0 0.0
          %1105 = vmatprep.subr.mxu0 0.0
          %1106 = vmatpush1.xpose.msra.mxu0 0.0
          %1107 = vmatprep.subr.mxu0 0.0
          %1108 = vmatpush1.xpose.msra.mxu0 0.0
          %1109 = vmatprep.subr.mxu0 0.0
          %1110 = vmatpush1.xpose.msra.mxu0 0.0
          %1111 = vmatprep.subr.mxu0 0.0
          %1112 = vmatpush1.xpose.msra.mxu0 0.0
          %1113 = vmatprep.subr.mxu0 0.0
          %1114 = vmatpush1.xpose.msra.mxu0 0.0
          %1115 = vmatprep.subr.mxu0 0.0
          %1116 = vmatpush1.xpose.msra.mxu0 0.0
          %1117 = vmatprep.subr.mxu0 0.0
          %1118 = vmatpush1.xpose.msra.mxu0 0.0
          %1119 = vmatprep.subr.mxu0 0.0
          %1120 = vmatpush1.xpose.msra.mxu0 0.0
          %1121 = vmatprep.subr.mxu0 0.0
          %1122 = vmatpush1.xpose.msra.mxu0 0.0
          %1123 = vmatprep.subr.mxu0 0.0
          %1124 = vmatpush1.xpose.msra.mxu0 0.0
          %1125 = vmatprep.subr.mxu0 0.0
          %1126 = vmatpush1.xpose.msra.mxu0 0.0
          %1127 = vmatprep.subr.mxu0 0.0
          %1128 = vmatpush1.xpose.msra.mxu0 0.0
          %1129 = vmatprep.subr.mxu0 0.0
          %1130 = vmatpush1.xpose.msra.mxu0 0.0
          %1131 = vmatprep.subr.mxu0 0.0
          %1132 = vmatpush1.xpose.msra.mxu0 0.0
          %1133 = vmatprep.subr.mxu0 0.0
          %1134 = vmatpush1.xpose.msra.mxu0 0.0
          %1135 = vmatprep.subr.mxu0 0.0
          %1136 = vmatpush1.xpose.msra.mxu0 0.0
          %1137 = vmatprep.subr.mxu0 0.0
          %1138 = vmatpush1.xpose.msra.mxu0 0.0
          %1139 = vmatprep.subr.mxu0 0.0
          %1140 = vmatpush1.xpose.msra.mxu0 0.0
          %1141 = vmatprep.subr.mxu0 0.0
          %1142 = vmatpush1.xpose.msra.mxu0 0.0
          %1143 = vmatprep.mubr.f32.mxu0 0.0
          %1144 = vmatmul.mubr.f32.gmra.mrb[0].mxu0 %v1075
          %v1145 = vpop.f32.mrb[0].mxu0
          %v1146 = vadd.f32 0.0, %v1145
          %v1147 = vpop.f32.mrb[0].mxu0
          %1148 = vdwg.mxu0
          %v1149 = vsel %vm555, %v1146, -1e+30
          %v1150 = vsel %vm556, %v1149, -inf
          %1151 = vmax.xlane.f32.xlu0 %v1150
          %v1152 = vpop.xlane.xlu0 %1151
          %v1153 = vmax.f32 %v462, %v1152
          %v1154 = vsub.f32 %v462, %v1153
          %v1155 = vmul.f32 %v1154, 1.442695
          %v1156 = vpow.pop %v1155
          %v1157 = vsub.f32 %v1149, %v1153
          %v1158 = vmul.f32 %v1157, 1.442695
          %v1159 = vpow.pop %v1158
          %v1160 = vmul.f32 %v1156, %v466
          %v1161 = vsel %vm556, %v1159, 0.0
          %1162 = vadd.xlane.f32.xlu0 %v1161
          %v1163 = vpop.xlane.xlu0 %1162
          %v1164 = vadd.f32 %v1160, %v1163
          %v1165 = vmul.f32 %v1156, %v470
          %1166 = vrot.lane.b32.xlu0 %v548, 72
          %v1167 = vpop.permute.xlu0 %1166
          %v1170 = vsel %vm556, %v1159, 0
          %1172 = vmatprep.subr.mxu0 0.0
          %1173 = vmatpush1.msra.mxu0 %v1167
          %1174 = vmatprep.subr.mxu0 0.0
          %1175 = vmatpush1.msra.mxu0 0.0
          %1176 = vmatprep.subr.mxu0 0.0
          %1177 = vmatpush1.msra.mxu0 0.0
          %1178 = vmatprep.subr.mxu0 0.0
          %1179 = vmatpush1.msra.mxu0 0.0
          %1180 = vmatprep.subr.mxu0 0.0
          %1181 = vmatpush1.msra.mxu0 0.0
          %1182 = vmatprep.subr.mxu0 0.0
          %1183 = vmatpush1.msra.mxu0 0.0
          %1184 = vmatprep.subr.mxu0 0.0
          %1185 = vmatpush1.msra.mxu0 0.0
          %1186 = vmatprep.subr.mxu0 0.0
          %1187 = vmatpush1.msra.mxu0 0.0
          %1188 = vmatprep.subr.mxu0 0.0
          %1189 = vmatpush1.msra.mxu0 0.0
          %1190 = vmatprep.subr.mxu0 0.0
          %1191 = vmatpush1.msra.mxu0 0.0
          %1192 = vmatprep.subr.mxu0 0.0
          %1193 = vmatpush1.msra.mxu0 0.0
          %1194 = vmatprep.subr.mxu0 0.0
          %1195 = vmatpush1.msra.mxu0 0.0
          %1196 = vmatprep.subr.mxu0 0.0
          %1197 = vmatpush1.msra.mxu0 0.0
          %1198 = vmatprep.subr.mxu0 0.0
          %1199 = vmatpush1.msra.mxu0 0.0
          %1200 = vmatprep.subr.mxu0 0.0
          %1201 = vmatpush1.msra.mxu0 0.0
          %1202 = vmatprep.subr.mxu0 0.0
          %1203 = vmatpush1.msra.mxu0 0.0
          %1204 = vmatprep.subr.mxu0 0.0
          %1205 = vmatpush1.msra.mxu0 0.0
          %1206 = vmatprep.subr.mxu0 0.0
          %1207 = vmatpush1.msra.mxu0 0.0
          %1208 = vmatprep.subr.mxu0 0.0
          %1209 = vmatpush1.msra.mxu0 0.0
          %1210 = vmatprep.subr.mxu0 0.0
          %1211 = vmatpush1.msra.mxu0 0.0
          %1212 = vmatprep.subr.mxu0 0.0
          %1213 = vmatpush1.msra.mxu0 0.0
          %1214 = vmatprep.subr.mxu0 0.0
          %1215 = vmatpush1.msra.mxu0 0.0
          %1216 = vmatprep.subr.mxu0 0.0
          %1217 = vmatpush1.msra.mxu0 0.0
          %1218 = vmatprep.subr.mxu0 0.0
          %1219 = vmatpush1.msra.mxu0 0.0
          %1220 = vmatprep.subr.mxu0 0.0
          %1221 = vmatpush1.msra.mxu0 0.0
          %1222 = vmatprep.subr.mxu0 0.0
          %1223 = vmatpush1.msra.mxu0 0.0
          %1224 = vmatprep.subr.mxu0 0.0
          %1225 = vmatpush1.msra.mxu0 0.0
          %1226 = vmatprep.subr.mxu0 0.0
          %1227 = vmatpush1.msra.mxu0 0.0
          %1228 = vmatprep.subr.mxu0 0.0
          %1229 = vmatpush1.msra.mxu0 0.0
          %1230 = vmatprep.subr.mxu0 0.0
          %1231 = vmatpush1.msra.mxu0 0.0
          %1232 = vmatprep.subr.mxu0 0.0
          %1233 = vmatpush1.msra.mxu0 0.0
          %1234 = vmatprep.subr.mxu0 0.0
          %1235 = vmatpush1.msra.mxu0 0.0
          %1236 = vmatprep.mubr.f32.mxu0 0.0
          %1237 = vmatmul.mubr.f32.gmra.mrb[0].mxu0 %v1170
          %v1238 = vpop.f32.mrb[0].mxu0
          %v1239 = vadd.f32 0.0, %v1238
          %v1240 = vpop.f32.mrb[0].mxu0
          %1241 = vdwg.mxu0
          %v1242 = vadd.f32 %v1165, %v1239
        $region69: #{tpu_custom_call.1} parent=43 // loop_footer
          %s456 = sadd.s32 %s454, 1
        $region70: #{tpu_custom_call.1} parent=43 // loop_footer_branch
          %453 = sbr.rel target = $region66
        $region71: #{tpu_custom_call.1} parent=43 // loop_exit
          _
        %v1243 = vld [vmem:[%s5] sm:$0x1]
        %v1244 = vrcp.pop %v463
        %v1245 = vmul.f32 %v467, %v1244
        %v1246 = vld [vmem:[#allocation10] sm:$0xff]
        %vm1247 = vcmask 64512
        %v1249 = vsel %vm1247, %v1245, 0
        %1251 = vmatprep.subr.mxu0 0.0
        %1252 = vmatpush1.msra.mxu0 %v1246
        %1253 = vmatprep.subr.mxu0 0.0
        %1254 = vmatpush1.msra.mxu0 0.0
        %1255 = vmatprep.subr.mxu0 0.0
        %1256 = vmatpush1.msra.mxu0 0.0
        %1257 = vmatprep.subr.mxu0 0.0
        %1258 = vmatpush1.msra.mxu0 0.0
        %1259 = vmatprep.subr.mxu0 0.0
        %1260 = vmatpush1.msra.mxu0 0.0
        %1261 = vmatprep.subr.mxu0 0.0
        %1262 = vmatpush1.msra.mxu0 0.0
        %1263 = vmatprep.subr.mxu0 0.0
        %1264 = vmatpush1.msra.mxu0 0.0
        %1265 = vmatprep.subr.mxu0 0.0
        %1266 = vmatpush1.msra.mxu0 0.0
        %1267 = vmatprep.subr.mxu0 0.0
        %1268 = vmatpush1.msra.mxu0 0.0
        %1269 = vmatprep.subr.mxu0 0.0
        %1270 = vmatpush1.msra.mxu0 0.0
        %1271 = vmatprep.subr.mxu0 0.0
        %1272 = vmatpush1.msra.mxu0 0.0
        %1273 = vmatprep.subr.mxu0 0.0
        %1274 = vmatpush1.msra.mxu0 0.0
        %1275 = vmatprep.subr.mxu0 0.0
        %1276 = vmatpush1.msra.mxu0 0.0
        %1277 = vmatprep.subr.mxu0 0.0
        %1278 = vmatpush1.msra.mxu0 0.0
        %1279 = vmatprep.subr.mxu0 0.0
        %1280 = vmatpush1.msra.mxu0 0.0
        %1281 = vmatprep.subr.mxu0 0.0
        %1282 = vmatpush1.msra.mxu0 0.0
        %1283 = vmatprep.subr.mxu0 0.0
        %1284 = vmatpush1.msra.mxu0 0.0
        %1285 = vmatprep.subr.mxu0 0.0
        %1286 = vmatpush1.msra.mxu0 0.0
        %1287 = vmatprep.subr.mxu0 0.0
        %1288 = vmatpush1.msra.mxu0 0.0
        %1289 = vmatprep.subr.mxu0 0.0
        %1290 = vmatpush1.msra.mxu0 0.0
        %1291 = vmatprep.subr.mxu0 0.0
        %1292 = vmatpush1.msra.mxu0 0.0
        %1293 = vmatprep.subr.mxu0 0.0
        %1294 = vmatpush1.msra.mxu0 0.0
        %1295 = vmatprep.subr.mxu0 0.0
        %1296 = vmatpush1.msra.mxu0 0.0
        %1297 = vmatprep.subr.mxu0 0.0
        %1298 = vmatpush1.msra.mxu0 0.0
        %1299 = vmatprep.subr.mxu0 0.0
        %1300 = vmatpush1.msra.mxu0 0.0
        %1301 = vmatprep.subr.mxu0 0.0
        %1302 = vmatpush1.msra.mxu0 0.0
        %1303 = vmatprep.subr.mxu0 0.0
        %1304 = vmatpush1.msra.mxu0 0.0
        %1305 = vmatprep.subr.mxu0 0.0
        %1306 = vmatpush1.msra.mxu0 0.0
        %1307 = vmatprep.subr.mxu0 0.0
        %1308 = vmatpush1.msra.mxu0 0.0
        %1309 = vmatprep.subr.mxu0 0.0
        %1310 = vmatpush1.msra.mxu0 0.0
        %1311 = vmatprep.subr.mxu0 0.0
        %1312 = vmatpush1.msra.mxu0 0.0
        %1313 = vmatprep.subr.mxu0 0.0
        %1314 = vmatpush1.msra.mxu0 0.0
        %1315 = vmatprep.mubr.f32.mxu0 0.0
        %1316 = vmatmul.mubr.f32.gmra.mrb[0].mxu0 %v1249
        %v1317 = vpop.f32.mrb[0].mxu0
        %v1318 = vadd.f32 0.0, %v1317
        %v1319 = vpop.f32.mrb[0].mxu0
        %1320 = vdwg.mxu0
        %v1322 = vlaneseq
        %v1323 = vshrl.u32 %v1322, 7
        %v1324 = vsub.s32 0, %v1323
        %v1325 = vrot.slane %v1243, %v1324
        %v1327 = vadd.f32 %v1325, %v1318
        %v1328 = vrcp.pop %v464
        %v1329 = vmul.f32 %v468, %v1328
        %v1330 = vld [vmem:[#allocation10 + $0x8] sm:$0xff]
        %v1332 = vsel %vm1247, %v1329, 0
        %1334 = vmatprep.subr.mxu0 0.0
        %1335 = vmatpush1.msra.mxu0 %v1330
        %1336 = vmatprep.subr.mxu0 0.0
        %1337 = vmatpush1.msra.mxu0 0.0
        %1338 = vmatprep.subr.mxu0 0.0
        %1339 = vmatpush1.msra.mxu0 0.0
        %1340 = vmatprep.subr.mxu0 0.0
        %1341 = vmatpush1.msra.mxu0 0.0
        %1342 = vmatprep.subr.mxu0 0.0
        %1343 = vmatpush1.msra.mxu0 0.0
        %1344 = vmatprep.subr.mxu0 0.0
        %1345 = vmatpush1.msra.mxu0 0.0
        %1346 = vmatprep.subr.mxu0 0.0
        %1347 = vmatpush1.msra.mxu0 0.0
        %1348 = vmatprep.subr.mxu0 0.0
        %1349 = vmatpush1.msra.mxu0 0.0
        %1350 = vmatprep.subr.mxu0 0.0
        %1351 = vmatpush1.msra.mxu0 0.0
        %1352 = vmatprep.subr.mxu0 0.0
        %1353 = vmatpush1.msra.mxu0 0.0
        %1354 = vmatprep.subr.mxu0 0.0
        %1355 = vmatpush1.msra.mxu0 0.0
        %1356 = vmatprep.subr.mxu0 0.0
        %1357 = vmatpush1.msra.mxu0 0.0
        %1358 = vmatprep.subr.mxu0 0.0
        %1359 = vmatpush1.msra.mxu0 0.0
        %1360 = vmatprep.subr.mxu0 0.0
        %1361 = vmatpush1.msra.mxu0 0.0
        %1362 = vmatprep.subr.mxu0 0.0
        %1363 = vmatpush1.msra.mxu0 0.0
        %1364 = vmatprep.subr.mxu0 0.0
        %1365 = vmatpush1.msra.mxu0 0.0
        %1366 = vmatprep.subr.mxu0 0.0
        %1367 = vmatpush1.msra.mxu0 0.0
        %1368 = vmatprep.subr.mxu0 0.0
        %1369 = vmatpush1.msra.mxu0 0.0
        %1370 = vmatprep.subr.mxu0 0.0
        %1371 = vmatpush1.msra.mxu0 0.0
        %1372 = vmatprep.subr.mxu0 0.0
        %1373 = vmatpush1.msra.mxu0 0.0
        %1374 = vmatprep.subr.mxu0 0.0
        %1375 = vmatpush1.msra.mxu0 0.0
        %1376 = vmatprep.subr.mxu0 0.0
        %1377 = vmatpush1.msra.mxu0 0.0
        %1378 = vmatprep.subr.mxu0 0.0
        %1379 = vmatpush1.msra.mxu0 0.0
        %1380 = vmatprep.subr.mxu0 0.0
        %1381 = vmatpush1.msra.mxu0 0.0
        %1382 = vmatprep.subr.mxu0 0.0
        %1383 = vmatpush1.msra.mxu0 0.0
        %1384 = vmatprep.subr.mxu0 0.0
        %1385 = vmatpush1.msra.mxu0 0.0
        %1386 = vmatprep.subr.mxu0 0.0
        %1387 = vmatpush1.msra.mxu0 0.0
        %1388 = vmatprep.subr.mxu0 0.0
        %1389 = vmatpush1.msra.mxu0 0.0
        %1390 = vmatprep.subr.mxu0 0.0
        %1391 = vmatpush1.msra.mxu0 0.0
        %1392 = vmatprep.subr.mxu0 0.0
        %1393 = vmatpush1.msra.mxu0 0.0
        %1394 = vmatprep.subr.mxu0 0.0
        %1395 = vmatpush1.msra.mxu0 0.0
        %1396 = vmatprep.subr.mxu0 0.0
        %1397 = vmatpush1.msra.mxu0 0.0
        %1398 = vmatprep.mubr.f32.mxu0 0.0
        %1399 = vmatmul.mubr.f32.gmra.mrb[0].mxu0 %v1332
        %v1400 = vpop.f32.mrb[0].mxu0
        %v1401 = vadd.f32 0.0, %v1400
        %v1402 = vpop.f32.mrb[0].mxu0
        %1403 = vdwg.mxu0
        %v1404 = vadd.f32 %v1327, %v1401
        %v1405 = vrcp.pop %v465
        %v1406 = vmul.f32 %v469, %v1405
        %v1407 = vld [vmem:[#allocation10 + $0x10] sm:$0xff]
        %v1409 = vsel %vm1247, %v1406, 0
        %1411 = vmatprep.subr.mxu0 0.0
        %1412 = vmatpush1.msra.mxu0 %v1407
        %1413 = vmatprep.subr.mxu0 0.0
        %1414 = vmatpush1.msra.mxu0 0.0
        %1415 = vmatprep.subr.mxu0 0.0
        %1416 = vmatpush1.msra.mxu0 0.0
        %1417 = vmatprep.subr.mxu0 0.0
        %1418 = vmatpush1.msra.mxu0 0.0
        %1419 = vmatprep.subr.mxu0 0.0
        %1420 = vmatpush1.msra.mxu0 0.0
        %1421 = vmatprep.subr.mxu0 0.0
        %1422 = vmatpush1.msra.mxu0 0.0
        %1423 = vmatprep.subr.mxu0 0.0
        %1424 = vmatpush1.msra.mxu0 0.0
        %1425 = vmatprep.subr.mxu0 0.0
        %1426 = vmatpush1.msra.mxu0 0.0
        %1427 = vmatprep.subr.mxu0 0.0
        %1428 = vmatpush1.msra.mxu0 0.0
        %1429 = vmatprep.subr.mxu0 0.0
        %1430 = vmatpush1.msra.mxu0 0.0
        %1431 = vmatprep.subr.mxu0 0.0
        %1432 = vmatpush1.msra.mxu0 0.0
        %1433 = vmatprep.subr.mxu0 0.0
        %1434 = vmatpush1.msra.mxu0 0.0
        %1435 = vmatprep.subr.mxu0 0.0
        %1436 = vmatpush1.msra.mxu0 0.0
        %1437 = vmatprep.subr.mxu0 0.0
        %1438 = vmatpush1.msra.mxu0 0.0
        %1439 = vmatprep.subr.mxu0 0.0
        %1440 = vmatpush1.msra.mxu0 0.0
        %1441 = vmatprep.subr.mxu0 0.0
        %1442 = vmatpush1.msra.mxu0 0.0
        %1443 = vmatprep.subr.mxu0 0.0
        %1444 = vmatpush1.msra.mxu0 0.0
        %1445 = vmatprep.subr.mxu0 0.0
        %1446 = vmatpush1.msra.mxu0 0.0
        %1447 = vmatprep.subr.mxu0 0.0
        %1448 = vmatpush1.msra.mxu0 0.0
        %1449 = vmatprep.subr.mxu0 0.0
        %1450 = vmatpush1.msra.mxu0 0.0
        %1451 = vmatprep.subr.mxu0 0.0
        %1452 = vmatpush1.msra.mxu0 0.0
        %1453 = vmatprep.subr.mxu0 0.0
        %1454 = vmatpush1.msra.mxu0 0.0
        %1455 = vmatprep.subr.mxu0 0.0
        %1456 = vmatpush1.msra.mxu0 0.0
        %1457 = vmatprep.subr.mxu0 0.0
        %1458 = vmatpush1.msra.mxu0 0.0
        %1459 = vmatprep.subr.mxu0 0.0
        %1460 = vmatpush1.msra.mxu0 0.0
        %1461 = vmatprep.subr.mxu0 0.0
        %1462 = vmatpush1.msra.mxu0 0.0
        %1463 = vmatprep.subr.mxu0 0.0
        %1464 = vmatpush1.msra.mxu0 0.0
        %1465 = vmatprep.subr.mxu0 0.0
        %1466 = vmatpush1.msra.mxu0 0.0
        %1467 = vmatprep.subr.mxu0 0.0
        %1468 = vmatpush1.msra.mxu0 0.0
        %1469 = vmatprep.subr.mxu0 0.0
        %1470 = vmatpush1.msra.mxu0 0.0
        %1471 = vmatprep.subr.mxu0 0.0
        %1472 = vmatpush1.msra.mxu0 0.0
        %1473 = vmatprep.subr.mxu0 0.0
        %1474 = vmatpush1.msra.mxu0 0.0
        %1475 = vmatprep.mubr.f32.mxu0 0.0
        %1476 = vmatmul.mubr.f32.gmra.mrb[0].mxu0 %v1409
        %v1477 = vpop.f32.mrb[0].mxu0
        %v1478 = vadd.f32 0.0, %v1477
        %v1479 = vpop.f32.mrb[0].mxu0
        %1480 = vdwg.mxu0
        %v1481 = vadd.f32 %v1404, %v1478
        %v1482 = vrcp.pop %v466
        %v1483 = vmul.f32 %v470, %v1482
        %v1484 = vld [vmem:[#allocation10 + $0x18] sm:$0xff]
        %v1486 = vsel %vm1247, %v1483, 0
        %1488 = vmatprep.subr.mxu0 0.0
        %1489 = vmatpush1.msra.mxu0 %v1484
        %1490 = vmatprep.subr.mxu0 0.0
        %1491 = vmatpush1.msra.mxu0 0.0
        %1492 = vmatprep.subr.mxu0 0.0
        %1493 = vmatpush1.msra.mxu0 0.0
        %1494 = vmatprep.subr.mxu0 0.0
        %1495 = vmatpush1.msra.mxu0 0.0
        %1496 = vmatprep.subr.mxu0 0.0
        %1497 = vmatpush1.msra.mxu0 0.0
        %1498 = vmatprep.subr.mxu0 0.0
        %1499 = vmatpush1.msra.mxu0 0.0
        %1500 = vmatprep.subr.mxu0 0.0
        %1501 = vmatpush1.msra.mxu0 0.0
        %1502 = vmatprep.subr.mxu0 0.0
        %1503 = vmatpush1.msra.mxu0 0.0
        %1504 = vmatprep.subr.mxu0 0.0
        %1505 = vmatpush1.msra.mxu0 0.0
        %1506 = vmatprep.subr.mxu0 0.0
        %1507 = vmatpush1.msra.mxu0 0.0
        %1508 = vmatprep.subr.mxu0 0.0
        %1509 = vmatpush1.msra.mxu0 0.0
        %1510 = vmatprep.subr.mxu0 0.0
        %1511 = vmatpush1.msra.mxu0 0.0
        %1512 = vmatprep.subr.mxu0 0.0
        %1513 = vmatpush1.msra.mxu0 0.0
        %1514 = vmatprep.subr.mxu0 0.0
        %1515 = vmatpush1.msra.mxu0 0.0
        %1516 = vmatprep.subr.mxu0 0.0
        %1517 = vmatpush1.msra.mxu0 0.0
        %1518 = vmatprep.subr.mxu0 0.0
        %1519 = vmatpush1.msra.mxu0 0.0
        %1520 = vmatprep.subr.mxu0 0.0
        %1521 = vmatpush1.msra.mxu0 0.0
        %1522 = vmatprep.subr.mxu0 0.0
        %1523 = vmatpush1.msra.mxu0 0.0
        %1524 = vmatprep.subr.mxu0 0.0
        %1525 = vmatpush1.msra.mxu0 0.0
        %1526 = vmatprep.subr.mxu0 0.0
        %1527 = vmatpush1.msra.mxu0 0.0
        %1528 = vmatprep.subr.mxu0 0.0
        %1529 = vmatpush1.msra.mxu0 0.0
        %1530 = vmatprep.subr.mxu0 0.0
        %1531 = vmatpush1.msra.mxu0 0.0
        %1532 = vmatprep.subr.mxu0 0.0
        %1533 = vmatpush1.msra.mxu0 0.0
        %1534 = vmatprep.subr.mxu0 0.0
        %1535 = vmatpush1.msra.mxu0 0.0
        %1536 = vmatprep.subr.mxu0 0.0
        %1537 = vmatpush1.msra.mxu0 0.0
        %1538 = vmatprep.subr.mxu0 0.0
        %1539 = vmatpush1.msra.mxu0 0.0
        %1540 = vmatprep.subr.mxu0 0.0
        %1541 = vmatpush1.msra.mxu0 0.0
        %1542 = vmatprep.subr.mxu0 0.0
        %1543 = vmatpush1.msra.mxu0 0.0
        %1544 = vmatprep.subr.mxu0 0.0
        %1545 = vmatpush1.msra.mxu0 0.0
        %1546 = vmatprep.subr.mxu0 0.0
        %1547 = vmatpush1.msra.mxu0 0.0
        %1548 = vmatprep.subr.mxu0 0.0
        %1549 = vmatpush1.msra.mxu0 0.0
        %1550 = vmatprep.subr.mxu0 0.0
        %1551 = vmatpush1.msra.mxu0 0.0
        %1552 = vmatprep.mubr.f32.mxu0 0.0
        %1553 = vmatmul.mubr.f32.gmra.mrb[0].mxu0 %v1486
        %v1554 = vpop.f32.mrb[0].mxu0
        %v1555 = vadd.f32 0.0, %v1554
        %v1556 = vpop.f32.mrb[0].mxu0
        %1557 = vdwg.mxu0
        %v1558 = vadd.f32 %v1481, %v1555
        %1559 = vst.msk [vmem:[%s367] sm:$0xff] %vm373, %v1558
        %s1560 = sand.u32 %s187, 1
        %s1561 = scalar_lea.sflag [#allocation4], %s1560
        %s1562 = sand.u32 %s187, 1
        %s1563 = smul.addr %s1562, 8
        %s1564 = scalar_lea.vmem [#allocation11], %s1563
        // Predicated region
        $region72: #{tpu_custom_call.1} parent=43 // pred_check
          %p1565 = pneg %p197
        $region73: #{tpu_custom_call.1} parent=43 // pred_check_branch
          %1567 = sbr.rel (%p1565) target = $region75
        $region74: #{tpu_custom_call.1} parent=43 // pred_region
          %s1569 = ssub.s32 128, 128
          %1570 = vsyncadd %s1561, %s1569
          %s1571 = smul.addr %s31, 2
          %s1572 = sadd.s32 %s32, %s1571
          %s1573 = smul.addr %s1572, 128
          %s1574 = scalar_lea.hbm %s6, %s1573
          %s1576 = sshll.u32 %s1564, 4
          %s1577 = int_to_ptr.vmem [resolvable:$true] %s1576
          %1579 = dma.vmem_to_hbm [thread:$0]  %s1577, 128, %s1574, %s1561
        $region75: #{tpu_custom_call.1} parent=43 // pred_fallthru
          _
      $region44: #{tpu_custom_call.1} parent=5 // pred_fallthru
        _
      %p1580 = scmp.le.s32.totalorder 2, %s22
      // Predicated region
      $region76: #{tpu_custom_call.1} parent=5 // pred_check
        %p1581 = pneg %p1580
      $region77: #{tpu_custom_call.1} parent=5 // pred_check_branch
        %1583 = sbr.rel (%p1581) target = $region79
      $region78: #{tpu_custom_call.1} parent=5 // pred_region
        %s1584 = ssub.s32 %s22, 2
        // Predicated region
        $region80: #{tpu_custom_call.1} parent=78 // pred_check
          %p1585 = pneg %p203
        $region81: #{tpu_custom_call.1} parent=78 // pred_check_branch
          %1587 = sbr.rel (%p1585) target = $region83
        $region82: #{tpu_custom_call.1} parent=78 // pred_region
          %s1588 = sand.u32 %s188, 1
          %s1589 = scalar_lea.sflag [#allocation4], %s1588
          %s1590 = sand.u32 %s188, 1
          %s1591 = smul.addr %s1590, 8
          %s1592 = scalar_lea.vmem [#allocation11], %s1591
          %1593 = dma.done %s1589, 128
        $region83: #{tpu_custom_call.1} parent=78 // pred_fallthru
          _
      $region79: #{tpu_custom_call.1} parent=5 // pred_fallthru
        _
    $region6: #{tpu_custom_call.1} parent=1 // loop_footer
      %s26 = sadd.s32 1, %s22
    $region7: #{tpu_custom_call.1} parent=1 // loop_footer_branch
      %21 = sbr.rel target = $region3
    $region8: #{tpu_custom_call.1} parent=1 // loop_exit
      _
    %1594 = vsyncpa [#allocation3], 1
    %s1595 = scalar_lea.sflag [#allocation3], 1
    %1596 = vsyncpa %s1595, 1
    %1597 = vsyncpa [#allocation6], 1
    %s1598 = scalar_lea.sflag [#allocation6], 1
    %1599 = vsyncpa %s1598, 1
    %1600 = vsyncpa [#allocation9], 1
    %1601 = vsyncpa [#allocation4], 1
    %s1602 = scalar_lea.sflag [#allocation4], 1
    %1603 = vsyncpa %s1602, 1

</llo_original>
